<compile_context>
chip_gen: v7x
topology: tpu7x:2x2x1
jax: 0.10.0
libtpu: 0.0.40
codegen_flags: <defaults>
</compile_context>

<pallas_src>
import jax
import jax.numpy as jnp
import numpy as np
from jax.experimental import pallas as pl
from jax.experimental.pallas import tpu as pltpu

EPS = 1e-5
_LANE = 128
_VMEM_LIMIT = 48 * 1024 * 1024   # headroom below v7x's 64 MiB physical VMEM


def _round_up(x, m):
    return (x + m - 1) // m * m


def _nbytes(a):
    return a.size * a.dtype.itemsize


def _pick_m_tile(m):
    # ~512 rows per tile (multiple of 8); smaller inputs use a single tile.
    return 512 if m >= 512 else max(8, _round_up(m, 8))


def _compiler_params():
    return pltpu.CompilerParams(
        dimension_semantics=("parallel",),
        vmem_limit_bytes=_VMEM_LIMIT,
    )


# ----------------------------- Pallas kernels ---------------------------------------
# Pass A: conv (im2col matmul, bf16 in / f32 acc) + per-tile BN partial stats.

def _conv_stats_kernel(p_ref, w_ref, y_ref, st_ref):
    y = jnp.dot(p_ref[...], w_ref[...], preferred_element_type=jnp.float32)
    y_ref[...] = y
    # single sweep: sum and sum-of-squares (var = E[y^2] - E[y]^2 later, in f32)
    st_ref[0] = jnp.concatenate(
        [jnp.sum(y, axis=0, keepdims=True),
         jnp.sum(y * y, axis=0, keepdims=True)], axis=0)


def _conv_proj_stats_kernel(p_ref, w_ref, xs_ref, ws_ref,
                            y_ref, s_ref, sty_ref, sts_ref):
    y = jnp.dot(p_ref[...], w_ref[...], preferred_element_type=jnp.float32)
    s = jnp.dot(xs_ref[...], ws_ref[...], preferred_element_type=jnp.float32)
    y_ref[...] = y
    s_ref[...] = s
    sty_ref[0] = jnp.concatenate(
        [jnp.sum(y, axis=0, keepdims=True),
         jnp.sum(y * y, axis=0, keepdims=True)], axis=0)
    sts_ref[0] = jnp.concatenate(
        [jnp.sum(s, axis=0, keepdims=True),
         jnp.sum(s * s, axis=0, keepdims=True)], axis=0)


# Pass B: fused BN affine (+ residual) + ReLU, packed scale/shift operand.

def _affine_relu_kernel(y_ref, ab_ref, o_ref):
    a = ab_ref[0:1, :]
    b = ab_ref[1:2, :]
    o_ref[...] = jnp.maximum(y_ref[...] * a + b, 0.0).astype(o_ref.dtype)


def _affine_add_relu_ident_kernel(y_ref, x_ref, ab_ref, o_ref):
    a = ab_ref[0:1, :]
    b = ab_ref[1:2, :]
    o_ref[...] = jnp.maximum(y_ref[...] * a + b + x_ref[...], 0.0).astype(o_ref.dtype)


def _affine_add_relu_proj_kernel(y_ref, s_ref, ab_ref, o_ref):
    a2 = ab_ref[0:1, :]
    b2 = ab_ref[1:2, :]
    a3 = ab_ref[2:3, :]
    b3 = ab_ref[3:4, :]
    o_ref[...] = jnp.maximum(
        y_ref[...] * a2 + b2 + s_ref[...] * a3 + b3, 0.0).astype(o_ref.dtype)


# ----------------------------- pallas_call wrappers ----------------------------------


def _conv_bn_stats(p, w, tm):
    mp_, k = p.shape
    cp = w.shape[1]
    nt = mp_ // tm
    return pl.pallas_call(
        _conv_stats_kernel,
        grid=(nt,),
        in_specs=[pl.BlockSpec((tm, k), lambda i: (i, 0)),
                  pl.BlockSpec((k, cp), lambda i: (0, 0))],      # resident weight
        out_specs=[pl.BlockSpec((tm, cp), lambda i: (i, 0)),
                   pl.BlockSpec((1, 2, cp), lambda i: (i, 0, 0))],
        out_shape=[jax.ShapeDtypeStruct((mp_, cp), jnp.float32),
                   jax.ShapeDtypeStruct((nt, 2, cp), jnp.float32)],
        compiler_params=_compiler_params(),
        cost_estimate=pl.CostEstimate(
            flops=2 * mp_ * k * cp, transcendentals=0,
            bytes_accessed=_nbytes(p) + _nbytes(w) + mp_ * cp * 4 + nt * 2 * cp * 4),
    )(p, w)


def _conv_bn_stats_proj(p, w, xs, ws, tm):
    mp_, k = p.shape
    cp = w.shape[1]
    cin = xs.shape[1]
    nt = mp_ // tm
    return pl.pallas_call(
        _conv_proj_stats_kernel,
        grid=(nt,),
        in_specs=[pl.BlockSpec((tm, k), lambda i: (i, 0)),
                  pl.BlockSpec((k, cp), lambda i: (0, 0)),
                  pl.BlockSpec((tm, cin), lambda i: (i, 0)),
                  pl.BlockSpec((cin, cp), lambda i: (0, 0))],
        out_specs=[pl.BlockSpec((tm, cp), lambda i: (i, 0)),
                   pl.BlockSpec((tm, cp), lambda i: (i, 0)),
                   pl.BlockSpec((1, 2, cp), lambda i: (i, 0, 0)),
                   pl.BlockSpec((1, 2, cp), lambda i: (i, 0, 0))],
        out_shape=[jax.ShapeDtypeStruct((mp_, cp), jnp.float32),
                   jax.ShapeDtypeStruct((mp_, cp), jnp.float32),
                   jax.ShapeDtypeStruct((nt, 2, cp), jnp.float32),
                   jax.ShapeDtypeStruct((nt, 2, cp), jnp.float32)],
        compiler_params=_compiler_params(),
        cost_estimate=pl.CostEstimate(
            flops=2 * mp_ * (k + cin) * cp, transcendentals=0,
            bytes_accessed=(_nbytes(p) + _nbytes(w) + _nbytes(xs) + _nbytes(ws)
                            + 2 * mp_ * cp * 4 + 2 * nt * 2 * cp * 4)),
    )(p, w, xs, ws)


def _bn_relu(y, ab, tm, out_dtype):
    mp_, cp = y.shape
    nt = mp_ // tm
    return pl.pallas_call(
        _affine_relu_kernel,
        grid=(nt,),
        in_specs=[pl.BlockSpec((tm, cp), lambda i: (i, 0)),
                  pl.BlockSpec((2, cp), lambda i: (0, 0))],
        out_specs=pl.BlockSpec((tm, cp), lambda i: (i, 0)),
        out_shape=jax.ShapeDtypeStruct((mp_, cp), out_dtype),
        compiler_params=_compiler_params(),
        cost_estimate=pl.CostEstimate(
            flops=3 * mp_ * cp, transcendentals=0,
            bytes_accessed=_nbytes(y) + _nbytes(ab)
            + mp_ * cp * jnp.dtype(out_dtype).itemsize),
    )(y, ab)


def _bn_add_relu_ident(y, xs, ab, tm):
    mp_, cp = y.shape
    nt = mp_ // tm
    return pl.pallas_call(
        _affine_add_relu_ident_kernel,
        grid=(nt,),
        in_specs=[pl.BlockSpec((tm, cp), lambda i: (i, 0)),
                  pl.BlockSpec((tm, cp), lambda i: (i, 0)),
                  pl.BlockSpec((2, cp), lambda i: (0, 0))],
        out_specs=pl.BlockSpec((tm, cp), lambda i: (i, 0)),
        out_shape=jax.ShapeDtypeStruct((mp_, cp), jnp.float32),
        compiler_params=_compiler_params(),
        cost_estimate=pl.CostEstimate(
            flops=4 * mp_ * cp, transcendentals=0,
            bytes_accessed=_nbytes(y) + _nbytes(xs) + _nbytes(ab) + mp_ * cp * 4),
    )(y, xs, ab)


def _bn_add_relu_proj(y, s, ab, tm):
    mp_, cp = y.shape
    nt = mp_ // tm
    return pl.pallas_call(
        _affine_add_relu_proj_kernel,
        grid=(nt,),
        in_specs=[pl.BlockSpec((tm, cp), lambda i: (i, 0)),
                  pl.BlockSpec((tm, cp), lambda i: (i, 0)),
                  pl.BlockSpec((4, cp), lambda i: (0, 0))],
        out_specs=pl.BlockSpec((tm, cp), lambda i: (i, 0)),
        out_shape=jax.ShapeDtypeStruct((mp_, cp), jnp.float32),
        compiler_params=_compiler_params(),
        cost_estimate=pl.CostEstimate(
            flops=6 * mp_ * cp, transcendentals=0,
            bytes_accessed=_nbytes(y) + _nbytes(s) + _nbytes(ab) + mp_ * cp * 4),
    )(y, s, ab)


# ----------------------------- JAX glue ----------------------------------------------


def _im2col_3x3(x, stride):
    # x: (N, H, W, C), pad=1, kernel 3x3.  Rows ordered (n, ho, wo); cols (dy, dx, c).
    n, h, w, c = x.shape
    xp = jnp.pad(x, ((0, 0), (1, 1), (1, 1), (0, 0)))
    ho = (h + 2 - 3) // stride + 1
    wo = (w + 2 - 3) // stride + 1
    cols = []
    for dy in range(3):
        for dx in range(3):
            cols.append(xp[:, dy:dy + stride * (ho - 1) + 1:stride,
                           dx:dx + stride * (wo - 1) + 1:stride, :])
    p = jnp.stack(cols, axis=3)                       # (n, ho, wo, 9, c)
    return p.reshape(n * ho * wo, 9 * c), ho, wo


def _bn_affine(stats, count, gamma, beta):
    # stats: (nt, 2, Cp) partial [sum, sumsq]; returns packed (2, Cp) [scale, shift].
    s = jnp.sum(stats, axis=0)
    mean = s[0] / count
    var = jnp.maximum(s[1] / count - mean * mean, 0.0)
    scale = gamma * jax.lax.rsqrt(var + EPS)
    shift = beta - mean * scale
    return jnp.stack([scale, shift], axis=0).astype(jnp.float32)


def _pad_cols(a, cp):
    return jnp.pad(a, ((0, 0), (0, cp - a.shape[1])))


def _pad_vec(v, cp):
    return jnp.pad(v, (0, cp - v.shape[0]))


# ----------------------------- BasicBlock module --------------------------------------


class BasicBlock:
    expansion = 1

    def __init__(self, in_planes, planes, stride=1, key=None):
        if key is None:
            key = jax.random.PRNGKey(0)
        k1, k2, k3 = jax.random.split(key, 3)
        self.stride = stride
        self.in_planes = in_planes
        self.planes = planes
        self.cp = _round_up(planes, _LANE)
        cp = self.cp

        # reference-layout (f32) parameters; BN gamma=1, beta=0 (PyTorch default)
        self.w1 = jax.random.normal(k1, (3, 3, in_planes, planes), jnp.float32) \
            * np.sqrt(2.0 / (9 * in_planes))
        self.g1 = jnp.ones((planes,), jnp.float32)
        self.b1 = jnp.zeros((planes,), jnp.float32)
        self.w2 = jax.random.normal(k2, (3, 3, planes, planes), jnp.float32) \
            * np.sqrt(2.0 / (9 * planes))
        self.g2 = jnp.ones((planes,), jnp.float32)
        self.b2 = jnp.zeros((planes,), jnp.float32)

        self.has_proj = (stride != 1) or (in_planes != self.expansion * planes)
        if self.has_proj:
            self.ws = jax.random.normal(k3, (in_planes, planes), jnp.float32) \
                * np.sqrt(2.0 / in_planes)
            self.gs = jnp.ones((planes,), jnp.float32)
            self.bs = jnp.zeros((planes,), jnp.float32)

        # kernel-side params: flattened, lane-dense padded (Cout -> cp), bf16 matmul inputs
        self.w1f = _pad_cols(self.w1.reshape(9 * in_planes, planes), cp).astype(jnp.bfloat16)
        self.w2f = _pad_cols(self.w2.reshape(9 * planes, planes), cp).astype(jnp.bfloat16)
        self.g1p, self.b1p = _pad_vec(self.g1, cp), _pad_vec(self.b1, cp)
        self.g2p, self.b2p = _pad_vec(self.g2, cp), _pad_vec(self.b2, cp)
        if self.has_proj:
            self.wsf = _pad_cols(self.ws, cp).astype(jnp.bfloat16)
            self.gsp, self.bsp = _pad_vec(self.gs, cp), _pad_vec(self.bs, cp)

    def __call__(self, x):
        # x: (N, H, W, Cin) NHWC, float32
        n, h, w, cin = x.shape
        planes, cp = self.planes, self.cp

        # ---- stage 1: conv1 + bn1 + relu -------------------------------------------
        p1, ho, wo = _im2col_3x3(x.astype(jnp.bfloat16), self.stride)
        m = p1.shape[0]                      # true row count (= N*Ho*Wo)
        tm = _pick_m_tile(m)
        mp = _round_up(m, tm)                # zero-padded rows contribute 0 to sums
        p1 = jnp.pad(p1, ((0, mp - m), (0, 0)))

        y1, st1 = _conv_bn_stats(p1, self.w1f, tm)
        ab1 = _bn_affine(st1, m, self.g1p, self.b1p)
        h1 = _bn_relu(y1, ab1, tm, jnp.bfloat16)                 # (mp, cp) bf16

        # ---- stage 2: conv2 + bn2 (+ shortcut) + relu --------------------------------
        h_img = h1[:m, :planes].reshape(n, ho, wo, planes)       # drop pad rows/chans
        p2, _, _ = _im2col_3x3(h_img, 1)
        p2 = jnp.pad(p2, ((0, mp - m), (0, 0)))

        if self.has_proj:
            xs = x[:, ::self.stride, ::self.stride, :].reshape(m, cin)
            xs = jnp.pad(xs, ((0, mp - m), (0, 0))).astype(jnp.bfloat16)
            y2, s2, st2, sts = _conv_bn_stats_proj(p2, self.w2f, xs, self.wsf, tm)
            ab2 = _bn_affine(st2, m, self.g2p, self.b2p)
            abs_ = _bn_affine(sts, m, self.gsp, self.bsp)
            out = _bn_add_relu_proj(y2, s2, jnp.concatenate([ab2, abs_], axis=0), tm)
        else:
            xs = x.reshape(m, cin)                               # identity: cin == planes
            xs = jnp.pad(xs, ((0, mp - m), (0, cp - cin)))       # f32, lane-dense
            y2, st2 = _conv_bn_stats(p2, self.w2f, tm)
            ab2 = _bn_affine(st2, m, self.g2p, self.b2p)
            out = _bn_add_relu_ident(y2, xs, ab2, tm)

        return out[:m, :planes].reshape(n, ho, wo, planes)


# ----------------------------- Pure-JAX reference (correctness only) ------------------


def _reference(block, x):
    hi = jax.lax.Precision.HIGHEST

    def conv3x3(v, w, stride):
        return jax.lax.conv_general_dilated(
            v, w, window_strides=(stride, stride), padding=((1, 1), (1, 1)),
            dimension_numbers=("NHWC", "HWIO", "NHWC"), precision=hi)

    def bn(y, g, b):
        mean = jnp.mean(y, axis=(0, 1, 2), keepdims=True)
        var = jnp.mean((y - mean) ** 2, axis=(0, 1, 2), keepdims=True)
        return (y - mean) * jax.lax.rsqrt(var + EPS) * g.reshape(1, 1, 1, -1) \
            + b.reshape(1, 1, 1, -1)

    out = jax.nn.relu(bn(conv3x3(x, block.w1, block.stride), block.g1, block.b1))
    out = bn(conv3x3(out, block.w2, 1), block.g2, block.b2)
    if block.has_proj:
        sc = jax.lax.conv_general_dilated(
            x, block.ws.reshape(1, 1, *block.ws.shape),
            window_strides=(block.stride, block.stride), padding="VALID",
            dimension_numbers=("NHWC", "HWIO", "NHWC"), precision=hi)
        sc = bn(sc, block.gs, block.bs)
    else:
        sc = x
    return jax.nn.relu(out + sc)


if __name__ == "__main__":
    key = jax.random.PRNGKey(0)
    kx, kp, kx2 = jax.random.split(key, 3)

    # The PyTorch module takes NCHW; generate NCHW then transpose to NHWC for the kernels.
    n, cin, h, w = 2, 4, 16, 16
    x_nchw = jax.random.normal(kx, (n, cin, h, w), jnp.float32)
    x = jnp.transpose(x_nchw, (0, 2, 3, 1))                      # (N, H, W, Cin)

    # bf16 MXU inputs (per perf guidance) -> compare at ~1e-2-level tolerance.
    TOL = 5e-2

    # Case 1: projection shortcut (stride=2, in_planes != planes).
    block = BasicBlock(in_planes=4, planes=8, stride=2, key=kp)
    out = jax.block_until_ready(jax.jit(lambda v: block(v))(x))
    ref = _reference(block, x)
    np.testing.assert_allclose(np.asarray(out), np.asarray(ref), rtol=TOL, atol=TOL)

    # Case 2: identity shortcut (stride=1, in_planes == planes).
    block2 = BasicBlock(in_planes=8, planes=8, stride=1, key=kp)
    x2 = jax.random.normal(kx2, (2, 16, 16, 8), jnp.float32)
    out2 = jax.block_until_ready(jax.jit(lambda v: block2(v))(x2))
    ref2 = _reference(block2, x2)
    np.testing.assert_allclose(np.asarray(out2), np.asarray(ref2), rtol=TOL, atol=TOL)

    print("KERNEL_OK")
</pallas_src>

<mosaic_0001>
module attributes {stable_mosaic.version = 11 : i64} {
  func.func @_affine_relu_kernel(%arg0: i32, %arg1: memref<128x128xf32, #tpu.memory_space<vmem>>, %arg2: memref<2x128xf32, #tpu.memory_space<vmem>>, %arg3: memref<128x128xbf16, #tpu.memory_space<vmem>>) attributes {dimension_semantics = [#tpu.dimension_semantics<parallel>], iteration_bounds = array<i64: 1>, scalar_prefetch = 0 : i64, scratch_operands = 0 : i64, tpu.core_type = #tpu.core_type<tc>, window_params = [{transform_indices = @transform_0, window_bounds = array<i64: 128, 128>}, {pipeline_mode = #tpu.pipeline_mode<synchronous>, transform_indices = @transform_1, window_bounds = array<i64: 2, 128>}, {transform_indices = @transform_2, window_bounds = array<i64: 128, 128>}]} {
    %c0 = arith.constant 0 : index
    %c0_0 = arith.constant 0 : index
    %0 = vector.load %arg2[%c0, %c0_0] : memref<2x128xf32, #tpu.memory_space<vmem>>, vector<1x128xf32>
    %c1 = arith.constant 1 : index
    %c0_1 = arith.constant 0 : index
    %1 = vector.load %arg2[%c1, %c0_1] : memref<2x128xf32, #tpu.memory_space<vmem>>, vector<1x128xf32>
    %c0_2 = arith.constant 0 : index
    %c0_3 = arith.constant 0 : index
    %2 = vector.load %arg1[%c0_2, %c0_3] : memref<128x128xf32, #tpu.memory_space<vmem>>, vector<128x128xf32>
    %3 = vector.broadcast %0 : vector<1x128xf32> to vector<128x128xf32>
    %4 = arith.mulf %2, %3 : vector<128x128xf32>
    %5 = vector.broadcast %1 : vector<1x128xf32> to vector<128x128xf32>
    %6 = arith.addf %4, %5 : vector<128x128xf32>
    %cst = arith.constant 0.000000e+00 : f32
    %7 = vector.broadcast %cst : f32 to vector<128x128xf32>
    %8 = arith.maximumf %6, %7 : vector<128x128xf32>
    %9 = arith.truncf %8 : vector<128x128xf32> to vector<128x128xbf16>
    %c0_4 = arith.constant 0 : index
    %c0_5 = arith.constant 0 : index
    %10 = vector.load %arg3[%c0_4, %c0_5] : memref<128x128xbf16, #tpu.memory_space<vmem>>, vector<128x128xbf16>
    tpu.vector_store %arg3[%c0_4, %c0_5], %9 {strides = array<i32>} : memref<128x128xbf16, #tpu.memory_space<vmem>>, vector<128x128xbf16>,
    return
  }
  func.func @transform_0(%arg0: i32) -> (i32, i32) {
    %c0_i32 = arith.constant 0 : i32
    %c0_i32_0 = arith.constant 0 : i32
    return %arg0, %c0_i32 : i32, i32
  }
  func.func @transform_1(%arg0: i32) -> (i32, i32) {
    %c0_i32 = arith.constant 0 : i32
    %c0_i32_0 = arith.constant 0 : i32
    %c0_i32_1 = arith.constant 0 : i32
    return %c0_i32, %c0_i32_0 : i32, i32
  }
  func.func @transform_2(%arg0: i32) -> (i32, i32) {
    %c0_i32 = arith.constant 0 : i32
    %c0_i32_0 = arith.constant 0 : i32
    return %arg0, %c0_i32 : i32, i32
  }
}

module attributes {stable_mosaic.version = 11 : i64} {
  func.func @_conv_stats_kernel(%arg0: i32, %arg1: memref<128x36xbf16, #tpu.memory_space<vmem>>, %arg2: memref<36x128xbf16, #tpu.memory_space<vmem>>, %arg3: memref<128x128xf32, #tpu.memory_space<vmem>>, %arg4: memref<1x2x128xf32, #tpu.memory_space<vmem>>) attributes {dimension_semantics = [#tpu.dimension_semantics<parallel>], iteration_bounds = array<i64: 1>, scalar_prefetch = 0 : i64, scratch_operands = 0 : i64, tpu.core_type = #tpu.core_type<tc>, window_params = [{transform_indices = @transform_0, window_bounds = array<i64: 128, 36>}, {pipeline_mode = #tpu.pipeline_mode<synchronous>, transform_indices = @transform_1, window_bounds = array<i64: 36, 128>}, {transform_indices = @transform_2, window_bounds = array<i64: 128, 128>}, {transform_indices = @transform_3, window_bounds = array<i64: 1, 2, 128>}]} {
    %c0 = arith.constant 0 : index
    %c0_0 = arith.constant 0 : index
    %0 = vector.load %arg1[%c0, %c0_0] : memref<128x36xbf16, #tpu.memory_space<vmem>>, vector<128x36xbf16>
    %c0_1 = arith.constant 0 : index
    %c0_2 = arith.constant 0 : index
    %1 = vector.load %arg2[%c0_1, %c0_2] : memref<36x128xbf16, #tpu.memory_space<vmem>>, vector<36x128xbf16>
    %cst = arith.constant dense<0.000000e+00> : vector<128x128xf32>
    %2 = tpu.matmul %0, %1, %cst {dimension_numbers = #tpu.dot_dimension_numbers<[1], [0], [0], [1], [0, 0, 1, 1], [], []>} : vector<128x36xbf16>, vector<36x128xbf16>, vector<128x128xf32> -> vector<128x128xf32>
    %c0_3 = arith.constant 0 : index
    %c0_4 = arith.constant 0 : index
    %3 = vector.load %arg3[%c0_3, %c0_4] : memref<128x128xf32, #tpu.memory_space<vmem>>, vector<128x128xf32>
    tpu.vector_store %arg3[%c0_3, %c0_4], %2 {strides = array<i32>} : memref<128x128xf32, #tpu.memory_space<vmem>>, vector<128x128xf32>,
    %cst_5 = arith.constant dense<0.000000e+00> : vector<128xf32>
    %4 = vector.multi_reduction <add>, %2, %cst_5 [0] : vector<128x128xf32> to vector<128xf32>
    %5 = vector.shape_cast %4 : vector<128xf32> to vector<1x128xf32>
    %6 = arith.mulf %2, %2 : vector<128x128xf32>
    %cst_6 = arith.constant dense<0.000000e+00> : vector<128xf32>
    %7 = vector.multi_reduction <add>, %6, %cst_6 [0] : vector<128x128xf32> to vector<128xf32>
    %8 = vector.shape_cast %7 : vector<128xf32> to vector<1x128xf32>
    %9 = tpu.concatenate %5, %8 in 0 : vector<1x128xf32>, vector<1x128xf32> -> vector<2x128xf32>
    %c0_7 = arith.constant 0 : index
    %c0_8 = arith.constant 0 : index
    %c0_9 = arith.constant 0 : index
    %10 = vector.load %arg4[%c0_7, %c0_8, %c0_9] : memref<1x2x128xf32, #tpu.memory_space<vmem>>, vector<1x2x128xf32>
    %11 = vector.shape_cast %10 : vector<1x2x128xf32> to vector<2x128xf32>
    %12 = vector.shape_cast %9 : vector<2x128xf32> to vector<1x2x128xf32>
    tpu.vector_store %arg4[%c0_7, %c0_8, %c0_9], %12 {strides = array<i32>} : memref<1x2x128xf32, #tpu.memory_space<vmem>>, vector<1x2x128xf32>,
    return
  }
  func.func @transform_0(%arg0: i32) -> (i32, i32) {
    %c0_i32 = arith.constant 0 : i32
    %c0_i32_0 = arith.constant 0 : i32
    return %arg0, %c0_i32 : i32, i32
  }
  func.func @transform_1(%arg0: i32) -> (i32, i32) {
    %c0_i32 = arith.constant 0 : i32
    %c0_i32_0 = arith.constant 0 : i32
    %c0_i32_1 = arith.constant 0 : i32
    return %c0_i32, %c0_i32_0 : i32, i32
  }
  func.func @transform_2(%arg0: i32) -> (i32, i32) {
    %c0_i32 = arith.constant 0 : i32
    %c0_i32_0 = arith.constant 0 : i32
    return %arg0, %c0_i32 : i32, i32
  }
  func.func @transform_3(%arg0: i32) -> (i32, i32, i32) {
    %c0_i32 = arith.constant 0 : i32
    %c0_i32_0 = arith.constant 0 : i32
    %c0_i32_1 = arith.constant 0 : i32
    return %arg0, %c0_i32, %c0_i32_0 : i32, i32, i32
  }
}

module attributes {stable_mosaic.version = 11 : i64} {
  func.func @_conv_proj_stats_kernel(%arg0: i32, %arg1: memref<128x72xbf16, #tpu.memory_space<vmem>>, %arg2: memref<72x128xbf16, #tpu.memory_space<vmem>>, %arg3: memref<128x4xbf16, #tpu.memory_space<vmem>>, %arg4: memref<4x128xbf16, #tpu.memory_space<vmem>>, %arg5: memref<128x128xf32, #tpu.memory_space<vmem>>, %arg6: memref<128x128xf32, #tpu.memory_space<vmem>>, %arg7: memref<1x2x128xf32, #tpu.memory_space<vmem>>, %arg8: memref<1x2x128xf32, #tpu.memory_space<vmem>>) attributes {dimension_semantics = [#tpu.dimension_semantics<parallel>], iteration_bounds = array<i64: 1>, scalar_prefetch = 0 : i64, scratch_operands = 0 : i64, tpu.core_type = #tpu.core_type<tc>, window_params = [{transform_indices = @transform_0, window_bounds = array<i64: 128, 72>}, {pipeline_mode = #tpu.pipeline_mode<synchronous>, transform_indices = @transform_1, window_bounds = array<i64: 72, 128>}, {transform_indices = @transform_2, window_bounds = array<i64: 128, 4>}, {pipeline_mode = #tpu.pipeline_mode<synchronous>, transform_indices = @transform_3, window_bounds = array<i64: 4, 128>}, {transform_indices = @transform_4, window_bounds = array<i64: 128, 128>}, {transform_indices = @transform_5, window_bounds = array<i64: 128, 128>}, {transform_indices = @transform_6, window_bounds = array<i64: 1, 2, 128>}, {transform_indices = @transform_7, window_bounds = array<i64: 1, 2, 128>}]} {
    %c0 = arith.constant 0 : index
    %c0_0 = arith.constant 0 : index
    %0 = vector.load %arg1[%c0, %c0_0] : memref<128x72xbf16, #tpu.memory_space<vmem>>, vector<128x72xbf16>
    %c0_1 = arith.constant 0 : index
    %c0_2 = arith.constant 0 : index
    %1 = vector.load %arg2[%c0_1, %c0_2] : memref<72x128xbf16, #tpu.memory_space<vmem>>, vector<72x128xbf16>
    %cst = arith.constant dense<0.000000e+00> : vector<128x128xf32>
    %2 = tpu.matmul %0, %1, %cst {dimension_numbers = #tpu.dot_dimension_numbers<[1], [0], [0], [1], [0, 0, 1, 1], [], []>} : vector<128x72xbf16>, vector<72x128xbf16>, vector<128x128xf32> -> vector<128x128xf32>
    %c0_3 = arith.constant 0 : index
    %c0_4 = arith.constant 0 : index
    %3 = vector.load %arg3[%c0_3, %c0_4] : memref<128x4xbf16, #tpu.memory_space<vmem>>, vector<128x4xbf16>
    %c0_5 = arith.constant 0 : index
    %c0_6 = arith.constant 0 : index
    %4 = vector.load %arg4[%c0_5, %c0_6] : memref<4x128xbf16, #tpu.memory_space<vmem>>, vector<4x128xbf16>
    %cst_7 = arith.constant dense<0.000000e+00> : vector<128x128xf32>
    %5 = tpu.matmul %3, %4, %cst_7 {dimension_numbers = #tpu.dot_dimension_numbers<[1], [0], [0], [1], [0, 0, 1, 1], [], []>} : vector<128x4xbf16>, vector<4x128xbf16>, vector<128x128xf32> -> vector<128x128xf32>
    %c0_8 = arith.constant 0 : index
    %c0_9 = arith.constant 0 : index
    %6 = vector.load %arg5[%c0_8, %c0_9] : memref<128x128xf32, #tpu.memory_space<vmem>>, vector<128x128xf32>
    tpu.vector_store %arg5[%c0_8, %c0_9], %2 {strides = array<i32>} : memref<128x128xf32, #tpu.memory_space<vmem>>, vector<128x128xf32>,
    %c0_10 = arith.constant 0 : index
    %c0_11 = arith.constant 0 : index
    %7 = vector.load %arg6[%c0_10, %c0_11] : memref<128x128xf32, #tpu.memory_space<vmem>>, vector<128x128xf32>
    tpu.vector_store %arg6[%c0_10, %c0_11], %5 {strides = array<i32>} : memref<128x128xf32, #tpu.memory_space<vmem>>, vector<128x128xf32>,
    %cst_12 = arith.constant dense<0.000000e+00> : vector<128xf32>
    %8 = vector.multi_reduction <add>, %2, %cst_12 [0] : vector<128x128xf32> to vector<128xf32>
    %9 = vector.shape_cast %8 : vector<128xf32> to vector<1x128xf32>
    %10 = arith.mulf %2, %2 : vector<128x128xf32>
    %cst_13 = arith.constant dense<0.000000e+00> : vector<128xf32>
    %11 = vector.multi_reduction <add>, %10, %cst_13 [0] : vector<128x128xf32> to vector<128xf32>
    %12 = vector.shape_cast %11 : vector<128xf32> to vector<1x128xf32>
    %13 = tpu.concatenate %9, %12 in 0 : vector<1x128xf32>, vector<1x128xf32> -> vector<2x128xf32>
    %c0_14 = arith.constant 0 : index
    %c0_15 = arith.constant 0 : index
    %c0_16 = arith.constant 0 : index
    %14 = vector.load %arg7[%c0_14, %c0_15, %c0_16] : memref<1x2x128xf32, #tpu.memory_space<vmem>>, vector<1x2x128xf32>
    %15 = vector.shape_cast %14 : vector<1x2x128xf32> to vector<2x128xf32>
    %16 = vector.shape_cast %13 : vector<2x128xf32> to vector<1x2x128xf32>
    tpu.vector_store %arg7[%c0_14, %c0_15, %c0_16], %16 {strides = array<i32>} : memref<1x2x128xf32, #tpu.memory_space<vmem>>, vector<1x2x128xf32>,
    %cst_17 = arith.constant dense<0.000000e+00> : vector<128xf32>
    %17 = vector.multi_reduction <add>, %5, %cst_17 [0] : vector<128x128xf32> to vector<128xf32>
    %18 = vector.shape_cast %17 : vector<128xf32> to vector<1x128xf32>
    %19 = arith.mulf %5, %5 : vector<128x128xf32>
    %cst_18 = arith.constant dense<0.000000e+00> : vector<128xf32>
    %20 = vector.multi_reduction <add>, %19, %cst_18 [0] : vector<128x128xf32> to vector<128xf32>
    %21 = vector.shape_cast %20 : vector<128xf32> to vector<1x128xf32>
    %22 = tpu.concatenate %18, %21 in 0 : vector<1x128xf32>, vector<1x128xf32> -> vector<2x128xf32>
    %c0_19 = arith.constant 0 : index
    %c0_20 = arith.constant 0 : index
    %c0_21 = arith.constant 0 : index
    %23 = vector.load %arg8[%c0_19, %c0_20, %c0_21] : memref<1x2x128xf32, #tpu.memory_space<vmem>>, vector<1x2x128xf32>
    %24 = vector.shape_cast %23 : vector<1x2x128xf32> to vector<2x128xf32>
    %25 = vector.shape_cast %22 : vector<2x128xf32> to vector<1x2x128xf32>
    tpu.vector_store %arg8[%c0_19, %c0_20, %c0_21], %25 {strides = array<i32>} : memref<1x2x128xf32, #tpu.memory_space<vmem>>, vector<1x2x128xf32>,
    return
  }
  func.func @transform_0(%arg0: i32) -> (i32, i32) {
    %c0_i32 = arith.constant 0 : i32
    %c0_i32_0 = arith.constant 0 : i32
    return %arg0, %c0_i32 : i32, i32
  }
  func.func @transform_1(%arg0: i32) -> (i32, i32) {
    %c0_i32 = arith.constant 0 : i32
    %c0_i32_0 = arith.constant 0 : i32
    %c0_i32_1 = arith.constant 0 : i32
    return %c0_i32, %c0_i32_0 : i32, i32
  }
  func.func @transform_2(%arg0: i32) -> (i32, i32) {
    %c0_i32 = arith.constant 0 : i32
    %c0_i32_0 = arith.constant 0 : i32
    return %arg0, %c0_i32 : i32, i32
  }
  func.func @transform_3(%arg0: i32) -> (i32, i32) {
    %c0_i32 = arith.constant 0 : i32
    %c0_i32_0 = arith.constant 0 : i32
    %c0_i32_1 = arith.constant 0 : i32
    return %c0_i32, %c0_i32_0 : i32, i32
  }
  func.func @transform_4(%arg0: i32) -> (i32, i32) {
    %c0_i32 = arith.constant 0 : i32
    %c0_i32_0 = arith.constant 0 : i32
    return %arg0, %c0_i32 : i32, i32
  }
  func.func @transform_5(%arg0: i32) -> (i32, i32) {
    %c0_i32 = arith.constant 0 : i32
    %c0_i32_0 = arith.constant 0 : i32
    return %arg0, %c0_i32 : i32, i32
  }
  func.func @transform_6(%arg0: i32) -> (i32, i32, i32) {
    %c0_i32 = arith.constant 0 : i32
    %c0_i32_0 = arith.constant 0 : i32
    %c0_i32_1 = arith.constant 0 : i32
    return %arg0, %c0_i32, %c0_i32_0 : i32, i32, i32
  }
  func.func @transform_7(%arg0: i32) -> (i32, i32, i32) {
    %c0_i32 = arith.constant 0 : i32
    %c0_i32_0 = arith.constant 0 : i32
    %c0_i32_1 = arith.constant 0 : i32
    return %arg0, %c0_i32, %c0_i32_0 : i32, i32, i32
  }
}

module attributes {stable_mosaic.version = 11 : i64} {
  func.func @_affine_add_relu_proj_kernel(%arg0: i32, %arg1: memref<128x128xf32, #tpu.memory_space<vmem>>, %arg2: memref<128x128xf32, #tpu.memory_space<vmem>>, %arg3: memref<4x128xf32, #tpu.memory_space<vmem>>, %arg4: memref<128x128xf32, #tpu.memory_space<vmem>>) attributes {dimension_semantics = [#tpu.dimension_semantics<parallel>], iteration_bounds = array<i64: 1>, scalar_prefetch = 0 : i64, scratch_operands = 0 : i64, tpu.core_type = #tpu.core_type<tc>, window_params = [{transform_indices = @transform_0, window_bounds = array<i64: 128, 128>}, {transform_indices = @transform_1, window_bounds = array<i64: 128, 128>}, {pipeline_mode = #tpu.pipeline_mode<synchronous>, transform_indices = @transform_2, window_bounds = array<i64: 4, 128>}, {transform_indices = @transform_3, window_bounds = array<i64: 128, 128>}]} {
    %c0 = arith.constant 0 : index
    %c0_0 = arith.constant 0 : index
    %0 = vector.load %arg3[%c0, %c0_0] : memref<4x128xf32, #tpu.memory_space<vmem>>, vector<1x128xf32>
    %c1 = arith.constant 1 : index
    %c0_1 = arith.constant 0 : index
    %1 = vector.load %arg3[%c1, %c0_1] : memref<4x128xf32, #tpu.memory_space<vmem>>, vector<1x128xf32>
    %c2 = arith.constant 2 : index
    %c0_2 = arith.constant 0 : index
    %2 = vector.load %arg3[%c2, %c0_2] : memref<4x128xf32, #tpu.memory_space<vmem>>, vector<1x128xf32>
    %c3 = arith.constant 3 : index
    %c0_3 = arith.constant 0 : index
    %3 = vector.load %arg3[%c3, %c0_3] : memref<4x128xf32, #tpu.memory_space<vmem>>, vector<1x128xf32>
    %c0_4 = arith.constant 0 : index
    %c0_5 = arith.constant 0 : index
    %4 = vector.load %arg1[%c0_4, %c0_5] : memref<128x128xf32, #tpu.memory_space<vmem>>, vector<128x128xf32>
    %5 = vector.broadcast %0 : vector<1x128xf32> to vector<128x128xf32>
    %6 = arith.mulf %4, %5 : vector<128x128xf32>
    %7 = vector.broadcast %1 : vector<1x128xf32> to vector<128x128xf32>
    %8 = arith.addf %6, %7 : vector<128x128xf32>
    %c0_6 = arith.constant 0 : index
    %c0_7 = arith.constant 0 : index
    %9 = vector.load %arg2[%c0_6, %c0_7] : memref<128x128xf32, #tpu.memory_space<vmem>>, vector<128x128xf32>
    %10 = vector.broadcast %2 : vector<1x128xf32> to vector<128x128xf32>
    %11 = arith.mulf %9, %10 : vector<128x128xf32>
    %12 = arith.addf %8, %11 : vector<128x128xf32>
    %13 = vector.broadcast %3 : vector<1x128xf32> to vector<128x128xf32>
    %14 = arith.addf %12, %13 : vector<128x128xf32>
    %cst = arith.constant 0.000000e+00 : f32
    %15 = vector.broadcast %cst : f32 to vector<128x128xf32>
    %16 = arith.maximumf %14, %15 : vector<128x128xf32>
    %c0_8 = arith.constant 0 : index
    %c0_9 = arith.constant 0 : index
    %17 = vector.load %arg4[%c0_8, %c0_9] : memref<128x128xf32, #tpu.memory_space<vmem>>, vector<128x128xf32>
    tpu.vector_store %arg4[%c0_8, %c0_9], %16 {strides = array<i32>} : memref<128x128xf32, #tpu.memory_space<vmem>>, vector<128x128xf32>,
    return
  }
  func.func @transform_0(%arg0: i32) -> (i32, i32) {
    %c0_i32 = arith.constant 0 : i32
    %c0_i32_0 = arith.constant 0 : i32
    return %arg0, %c0_i32 : i32, i32
  }
  func.func @transform_1(%arg0: i32) -> (i32, i32) {
    %c0_i32 = arith.constant 0 : i32
    %c0_i32_0 = arith.constant 0 : i32
    return %arg0, %c0_i32 : i32, i32
  }
  func.func @transform_2(%arg0: i32) -> (i32, i32) {
    %c0_i32 = arith.constant 0 : i32
    %c0_i32_0 = arith.constant 0 : i32
    %c0_i32_1 = arith.constant 0 : i32
    return %c0_i32, %c0_i32_0 : i32, i32
  }
  func.func @transform_3(%arg0: i32) -> (i32, i32) {
    %c0_i32 = arith.constant 0 : i32
    %c0_i32_0 = arith.constant 0 : i32
    return %arg0, %c0_i32 : i32, i32
  }
}

</mosaic_0001>

<llo_original>
// kernel: _lambda_.5
$region0: #{_lambda_.5}
  #allocation0 [shape = 'u32[]', space=smem, size = 0x4, offset = 0x4, fixed_abs, tag = 'smem constant byte address 0x4 - core index']
  #allocation1 [shape = 'u32[144,128]{1,0:T(1,128)}', space=vmem, size = 0x12000, scoped, tag = 'internal scratch']
  %s0 = inlined_call_operand.vmem [shape: f32[128,128], index: 0, kind: input, shape index: {}]
  %s1 = inlined_call_operand.vmem [shape: f32[2,128], index: 1, kind: input, shape index: {}]
  %s2 = inlined_call_operand.vmem [shape: bf16[128,128], index: 2, kind: output, shape index: {}]
  %s3 = sld [smem:[#allocation0]]
  $region18: #{_lambda_.5} parent=0
    _
  %s5 = ssub.s32 1, %s3
  %s6 = scalar_select 0, %s5, %s3
  // Predicated region
  $region2: #{_lambda_.5} parent=0 // pred_check
    _
  $region3: #{_lambda_.5} parent=0 // pred_check_branch
    %8 = sbr.rel (0) target = $region5
  $region4: #{_lambda_.5} parent=0 // pred_region
    _
  $region5: #{_lambda_.5} parent=0 // pred_fallthru
    _
  // Predicated region
  $region6: #{_lambda_.5} parent=0 // pred_check
    _
  $region7: #{_lambda_.5} parent=0 // pred_check_branch
    %10 = sbr.rel (0) target = $region9
  $region8: #{_lambda_.5} parent=0 // pred_region
    _
  $region9: #{_lambda_.5} parent=0 // pred_fallthru
    _
  %v11 = vld [vmem:[%s1] sm:$0x1]
  %v12 = vld [vmem:[%s1 + $0x1] sm:$0x1]
  %v13 = vld [vmem:[%s0] sm:$0xff]
  %v14 = vld [vmem:[%s0 + $0x8] sm:$0xff]
  %v15 = vld [vmem:[%s0 + $0x10] sm:$0xff]
  %v16 = vld [vmem:[%s0 + $0x18] sm:$0xff]
  %v17 = vld [vmem:[%s0 + $0x20] sm:$0xff]
  %v18 = vld [vmem:[%s0 + $0x28] sm:$0xff]
  %v19 = vld [vmem:[%s0 + $0x30] sm:$0xff]
  %v20 = vld [vmem:[%s0 + $0x38] sm:$0xff]
  %v21 = vld [vmem:[%s0 + $0x40] sm:$0xff]
  %v22 = vld [vmem:[%s0 + $0x48] sm:$0xff]
  %v23 = vld [vmem:[%s0 + $0x50] sm:$0xff]
  %v24 = vld [vmem:[%s0 + $0x58] sm:$0xff]
  %v25 = vld [vmem:[%s0 + $0x60] sm:$0xff]
  %v26 = vld [vmem:[%s0 + $0x68] sm:$0xff]
  %v27 = vld [vmem:[%s0 + $0x70] sm:$0xff]
  %v28 = vld [vmem:[%s0 + $0x78] sm:$0xff]
  %v29 = vlaneseq
  %v30 = vshrl.u32 %v29, 7
  %v31 = vsub.s32 0, %v30
  %v32 = vrot.slane %v11, %v31
  %v33 = vmul.f32 %v13, %v32
  %v34 = vmul.f32 %v14, %v32
  %v35 = vmul.f32 %v15, %v32
  %v36 = vmul.f32 %v16, %v32
  %v37 = vmul.f32 %v17, %v32
  %v38 = vmul.f32 %v18, %v32
  %v39 = vmul.f32 %v19, %v32
  %v40 = vmul.f32 %v20, %v32
  %v41 = vmul.f32 %v21, %v32
  %v42 = vmul.f32 %v22, %v32
  %v43 = vmul.f32 %v23, %v32
  %v44 = vmul.f32 %v24, %v32
  %v45 = vmul.f32 %v25, %v32
  %v46 = vmul.f32 %v26, %v32
  %v47 = vmul.f32 %v27, %v32
  %v48 = vmul.f32 %v28, %v32
  %v49 = vlaneseq
  %v50 = vshrl.u32 %v49, 7
  %v51 = vsub.s32 0, %v50
  %v52 = vrot.slane %v12, %v51
  %v53 = vadd.f32 %v33, %v52
  %v54 = vadd.f32 %v34, %v52
  %v55 = vadd.f32 %v35, %v52
  %v56 = vadd.f32 %v36, %v52
  %v57 = vadd.f32 %v37, %v52
  %v58 = vadd.f32 %v38, %v52
  %v59 = vadd.f32 %v39, %v52
  %v60 = vadd.f32 %v40, %v52
  %v61 = vadd.f32 %v41, %v52
  %v62 = vadd.f32 %v42, %v52
  %v63 = vadd.f32 %v43, %v52
  %v64 = vadd.f32 %v44, %v52
  %v65 = vadd.f32 %v45, %v52
  %v66 = vadd.f32 %v46, %v52
  %v67 = vadd.f32 %v47, %v52
  %v68 = vadd.f32 %v48, %v52
  %v69 = vmax.f32 %v53, 0.0
  %v70 = vmax.f32 %v54, 0.0
  %v71 = vmax.f32 %v55, 0.0
  %v72 = vmax.f32 %v56, 0.0
  %v73 = vmax.f32 %v57, 0.0
  %v74 = vmax.f32 %v58, 0.0
  %v75 = vmax.f32 %v59, 0.0
  %v76 = vmax.f32 %v60, 0.0
  %v77 = vmax.f32 %v61, 0.0
  %v78 = vmax.f32 %v62, 0.0
  %v79 = vmax.f32 %v63, 0.0
  %v80 = vmax.f32 %v64, 0.0
  %v81 = vmax.f32 %v65, 0.0
  %v82 = vmax.f32 %v66, 0.0
  %v83 = vmax.f32 %v67, 0.0
  %v84 = vmax.f32 %v68, 0.0
  %v85 = vpack.c.bf16 %v70, %v69
  %v86 = vpack.c.bf16 %v72, %v71
  %v87 = vpack.c.bf16 %v74, %v73
  %v88 = vpack.c.bf16 %v76, %v75
  %v89 = vpack.c.bf16 %v78, %v77
  %v90 = vpack.c.bf16 %v80, %v79
  %v91 = vpack.c.bf16 %v82, %v81
  %v92 = vpack.c.bf16 %v84, %v83
  %v101 = vunpack.c.l.b16 %v85
  %v102 = vunpack.c.h.b16 %v85
  %v103 = vunpack.c.l.b16 %v86
  %v104 = vunpack.c.h.b16 %v86
  %v105 = vunpack.c.l.b16 %v87
  %v106 = vunpack.c.h.b16 %v87
  %v107 = vunpack.c.l.b16 %v88
  %v108 = vunpack.c.h.b16 %v88
  %v109 = vunpack.c.l.b16 %v89
  %v110 = vunpack.c.h.b16 %v89
  %v111 = vunpack.c.l.b16 %v90
  %v112 = vunpack.c.h.b16 %v90
  %v113 = vunpack.c.l.b16 %v91
  %v114 = vunpack.c.h.b16 %v91
  %v115 = vunpack.c.l.b16 %v92
  %v116 = vunpack.c.h.b16 %v92
  %v117 = vpack.c.b16 %v101, %v101
  %v118 = vpack.c.b16 %v102, %v102
  %v119 = vpack.c.b16 %v103, %v103
  %v120 = vpack.c.b16 %v104, %v104
  %v121 = vpack.c.b16 %v105, %v105
  %v122 = vpack.c.b16 %v106, %v106
  %v123 = vpack.c.b16 %v107, %v107
  %v124 = vpack.c.b16 %v108, %v108
  %v125 = vpack.c.b16 %v109, %v109
  %v126 = vpack.c.b16 %v110, %v110
  %v127 = vpack.c.b16 %v111, %v111
  %v128 = vpack.c.b16 %v112, %v112
  %v129 = vpack.c.b16 %v113, %v113
  %v130 = vpack.c.b16 %v114, %v114
  %v131 = vpack.c.b16 %v115, %v115
  %v132 = vpack.c.b16 %v116, %v116
  %149 = vst [vmem:[%s2] sm:$0xf] %v117
  %150 = vst [vmem:[%s2 + $0x4] sm:$0xf] %v118
  %151 = vst [vmem:[%s2 + $0x8] sm:$0xf] %v119
  %152 = vst [vmem:[%s2 + $0xc] sm:$0xf] %v120
  %153 = vst [vmem:[%s2 + $0x10] sm:$0xf] %v121
  %154 = vst [vmem:[%s2 + $0x14] sm:$0xf] %v122
  %155 = vst [vmem:[%s2 + $0x18] sm:$0xf] %v123
  %156 = vst [vmem:[%s2 + $0x1c] sm:$0xf] %v124
  %157 = vst [vmem:[%s2 + $0x20] sm:$0xf] %v125
  %158 = vst [vmem:[%s2 + $0x24] sm:$0xf] %v126
  %159 = vst [vmem:[%s2 + $0x28] sm:$0xf] %v127
  %160 = vst [vmem:[%s2 + $0x2c] sm:$0xf] %v128
  %161 = vst [vmem:[%s2 + $0x30] sm:$0xf] %v129
  %162 = vst [vmem:[%s2 + $0x34] sm:$0xf] %v130
  %163 = vst [vmem:[%s2 + $0x38] sm:$0xf] %v131
  %164 = vst [vmem:[%s2 + $0x3c] sm:$0xf] %v132
  // Predicated region
  $region10: #{_lambda_.5} parent=0 // pred_check
    _
  $region11: #{_lambda_.5} parent=0 // pred_check_branch
    %166 = sbr.rel (0) target = $region13
  $region12: #{_lambda_.5} parent=0 // pred_region
    _
  $region13: #{_lambda_.5} parent=0 // pred_fallthru
    _
  // Predicated region
  $region14: #{_lambda_.5} parent=0 // pred_check
    _
  $region15: #{_lambda_.5} parent=0 // pred_check_branch
    %168 = sbr.rel (0) target = $region17
  $region16: #{_lambda_.5} parent=0 // pred_region
    _
  $region17: #{_lambda_.5} parent=0 // pred_fallthru
    _

// kernel: _lambda_.4
$region0: #{_lambda_.4}
  #allocation0 [shape = 'u32[]', space=smem, size = 0x4, offset = 0x4, fixed_abs, tag = 'smem constant byte address 0x4 - core index']
  #allocation1 [shape = 'u32[144,128]{1,0:T(1,128)}', space=vmem, size = 0x12000, scoped, tag = 'internal scratch']
  %s0 = inlined_call_operand.vmem [shape: bf16[128,36], index: 0, kind: input, shape index: {}]
  %s1 = inlined_call_operand.vmem [shape: bf16[36,128], index: 1, kind: input, shape index: {}]
  %s2 = inlined_call_operand.vmem [shape: f32[128,128], index: 2, kind: output, shape index: {0}]
  %s3 = inlined_call_operand.vmem [shape: f32[1,2,128], index: 3, kind: output, shape index: {1}]
  %4 = xla_tuple %s2, %s3
  %s5 = sld [smem:[#allocation0]]
  $region26: #{_lambda_.4} parent=0
    _
  %s7 = ssub.s32 1, %s5
  %s8 = scalar_select 0, %s7, %s5
  // Predicated region
  $region2: #{_lambda_.4} parent=0 // pred_check
    _
  $region3: #{_lambda_.4} parent=0 // pred_check_branch
    %10 = sbr.rel (0) target = $region5
  $region4: #{_lambda_.4} parent=0 // pred_region
    _
  $region5: #{_lambda_.4} parent=0 // pred_fallthru
    _
  // Predicated region
  $region6: #{_lambda_.4} parent=0 // pred_check
    _
  $region7: #{_lambda_.4} parent=0 // pred_check_branch
    %12 = sbr.rel (0) target = $region9
  $region8: #{_lambda_.4} parent=0 // pred_region
    _
  $region9: #{_lambda_.4} parent=0 // pred_fallthru
    _
  %v14 = vld [vmem:[%s0] sm:$0xf]
  %v15 = vld [vmem:[%s0 + $0x4] sm:$0xf]
  %v16 = vld [vmem:[%s0 + $0x8] sm:$0xf]
  %v17 = vld [vmem:[%s0 + $0xc] sm:$0xf]
  %v18 = vld [vmem:[%s0 + $0x10] sm:$0xf]
  %v19 = vld [vmem:[%s0 + $0x14] sm:$0xf]
  %v20 = vld [vmem:[%s0 + $0x18] sm:$0xf]
  %v21 = vld [vmem:[%s0 + $0x1c] sm:$0xf]
  %v22 = vld [vmem:[%s0 + $0x20] sm:$0xf]
  %v23 = vld [vmem:[%s0 + $0x24] sm:$0xf]
  %v24 = vld [vmem:[%s0 + $0x28] sm:$0xf]
  %v25 = vld [vmem:[%s0 + $0x2c] sm:$0xf]
  %v26 = vld [vmem:[%s0 + $0x30] sm:$0xf]
  %v27 = vld [vmem:[%s0 + $0x34] sm:$0xf]
  %v28 = vld [vmem:[%s0 + $0x38] sm:$0xf]
  %v29 = vld [vmem:[%s0 + $0x3c] sm:$0xf]
  %v30 = vld [vmem:[%s1] sm:$0xf]
  %v31 = vld [vmem:[%s1 + $0x4] sm:$0xf]
  %v32 = vld [vmem:[%s1 + $0x8] sm:$0xf]
  %v33 = vld [vmem:[%s1 + $0xc] sm:$0xf]
  %v34 = vld [vmem:[%s1 + $0x10] sm:$0x3]
  %v51 = vunpack.c.l.b16 %v14
  %v52 = vunpack.c.l.b16 %v15
  %v53 = vunpack.c.l.b16 %v16
  %v54 = vunpack.c.l.b16 %v17
  %v55 = vunpack.c.l.b16 %v18
  %v56 = vunpack.c.l.b16 %v19
  %v57 = vunpack.c.l.b16 %v20
  %v58 = vunpack.c.l.b16 %v21
  %v59 = vunpack.c.l.b16 %v22
  %v60 = vunpack.c.l.b16 %v23
  %v61 = vunpack.c.l.b16 %v24
  %v62 = vunpack.c.l.b16 %v25
  %v63 = vunpack.c.l.b16 %v26
  %v64 = vunpack.c.l.b16 %v27
  %v65 = vunpack.c.l.b16 %v28
  %v66 = vunpack.c.l.b16 %v29
  %v67 = vpack.c.b16 %v52, %v51
  %v68 = vpack.c.b16 %v54, %v53
  %v69 = vpack.c.b16 %v56, %v55
  %v70 = vpack.c.b16 %v58, %v57
  %v71 = vpack.c.b16 %v60, %v59
  %v72 = vpack.c.b16 %v62, %v61
  %v73 = vpack.c.b16 %v64, %v63
  %v74 = vpack.c.b16 %v66, %v65
  %v80 = vunpack.c.l.b16 %v30
  %v81 = vunpack.c.l.b16 %v31
  %v82 = vunpack.c.l.b16 %v32
  %v83 = vunpack.c.l.b16 %v33
  %v84 = vunpack.c.l.b16 %v34
  %v85 = vpack.c.b16 %v81, %v80
  %v86 = vpack.c.b16 %v83, %v82
  %v87 = vpack.c.b16 %v84, %v84
  %vm90 = vcmask 293888
  %v92 = vsel %vm90, %v67, 0
  %v95 = vsel %vm90, %v68, 0
  %v98 = vsel %vm90, %v69, 0
  %v101 = vsel %vm90, %v70, 0
  %v104 = vsel %vm90, %v71, 0
  %v107 = vsel %vm90, %v72, 0
  %v110 = vsel %vm90, %v73, 0
  %v113 = vsel %vm90, %v74, 0
  %vm115 = vcmask 1041408
  %v117 = vsel %vm115, %v87, 0
  %119 = vmatprep.subr.bf16.mxu0 0
  %120 = vmatpush1.bf16.msra.mxu0 %v85
  %121 = vmatprep.subr.bf16.mxu0 0
  %122 = vmatpush1.bf16.msra.mxu0 %v86
  %123 = vmatprep.subr.bf16.mxu0 0
  %124 = vmatpush1.bf16.msra.mxu0 %v117
  %125 = vmatprep.subr.bf16.mxu0 0
  %126 = vmatpush1.bf16.msra.mxu0 0
  %127 = vmatprep.subr.bf16.mxu0 0
  %128 = vmatpush1.bf16.msra.mxu0 0
  %129 = vmatprep.subr.bf16.mxu0 0
  %130 = vmatpush1.bf16.msra.mxu0 0
  %131 = vmatprep.subr.bf16.mxu0 0
  %132 = vmatpush1.bf16.msra.mxu0 0
  %133 = vmatprep.subr.bf16.mxu0 0
  %134 = vmatpush1.bf16.msra.mxu0 0
  %135 = vmatprep.subr.bf16.mxu0 0
  %136 = vmatpush1.bf16.msra.mxu0 0
  %137 = vmatprep.subr.bf16.mxu0 0
  %138 = vmatpush1.bf16.msra.mxu0 0
  %139 = vmatprep.subr.bf16.mxu0 0
  %140 = vmatpush1.bf16.msra.mxu0 0
  %141 = vmatprep.subr.bf16.mxu0 0
  %142 = vmatpush1.bf16.msra.mxu0 0
  %143 = vmatprep.subr.bf16.mxu0 0
  %144 = vmatpush1.bf16.msra.mxu0 0
  %145 = vmatprep.subr.bf16.mxu0 0
  %146 = vmatpush1.bf16.msra.mxu0 0
  %147 = vmatprep.subr.bf16.mxu0 0
  %148 = vmatpush1.bf16.msra.mxu0 0
  %149 = vmatprep.subr.bf16.mxu0 0
  %150 = vmatpush1.bf16.msra.mxu0 0
  %151 = vmatprep.mubr.bf16.mxu0 0
  %152 = vmatmul.mubr.bf16.gmra.mrb[0].mxu0 %v92
  %v153 = vpop.f32.mrb[0].mxu0
  %v154 = vadd.f32 0.0, %v153
  %v155 = vpop.f32.mrb[0].mxu0
  %v156 = vpop.f32.mrb[0].mxu0
  %v157 = vadd.f32 0.0, %v156
  %v158 = vpop.f32.mrb[0].mxu0
  %159 = vmatprep.mubr.bf16.mxu0 0
  %160 = vmatmul.mubr.bf16.gmra.mrb[0].mxu0 %v95
  %v161 = vpop.f32.mrb[0].mxu0
  %v162 = vadd.f32 0.0, %v161
  %v163 = vpop.f32.mrb[0].mxu0
  %v164 = vpop.f32.mrb[0].mxu0
  %v165 = vadd.f32 0.0, %v164
  %v166 = vpop.f32.mrb[0].mxu0
  %167 = vmatprep.mubr.bf16.mxu0 0
  %168 = vmatmul.mubr.bf16.gmra.mrb[0].mxu0 %v98
  %v169 = vpop.f32.mrb[0].mxu0
  %v170 = vadd.f32 0.0, %v169
  %v171 = vpop.f32.mrb[0].mxu0
  %v172 = vpop.f32.mrb[0].mxu0
  %v173 = vadd.f32 0.0, %v172
  %v174 = vpop.f32.mrb[0].mxu0
  %175 = vmatprep.mubr.bf16.mxu0 0
  %176 = vmatmul.mubr.bf16.gmra.mrb[0].mxu0 %v101
  %v177 = vpop.f32.mrb[0].mxu0
  %v178 = vadd.f32 0.0, %v177
  %v179 = vpop.f32.mrb[0].mxu0
  %v180 = vpop.f32.mrb[0].mxu0
  %v181 = vadd.f32 0.0, %v180
  %v182 = vpop.f32.mrb[0].mxu0
  %183 = vmatprep.mubr.bf16.mxu0 0
  %184 = vmatmul.mubr.bf16.gmra.mrb[0].mxu0 %v104
  %v185 = vpop.f32.mrb[0].mxu0
  %v186 = vadd.f32 0.0, %v185
  %v187 = vpop.f32.mrb[0].mxu0
  %v188 = vpop.f32.mrb[0].mxu0
  %v189 = vadd.f32 0.0, %v188
  %v190 = vpop.f32.mrb[0].mxu0
  %191 = vmatprep.mubr.bf16.mxu0 0
  %192 = vmatmul.mubr.bf16.gmra.mrb[0].mxu0 %v107
  %v193 = vpop.f32.mrb[0].mxu0
  %v194 = vadd.f32 0.0, %v193
  %v195 = vpop.f32.mrb[0].mxu0
  %v196 = vpop.f32.mrb[0].mxu0
  %v197 = vadd.f32 0.0, %v196
  %v198 = vpop.f32.mrb[0].mxu0
  %199 = vmatprep.mubr.bf16.mxu0 0
  %200 = vmatmul.mubr.bf16.gmra.mrb[0].mxu0 %v110
  %v201 = vpop.f32.mrb[0].mxu0
  %v202 = vadd.f32 0.0, %v201
  %v203 = vpop.f32.mrb[0].mxu0
  %v204 = vpop.f32.mrb[0].mxu0
  %v205 = vadd.f32 0.0, %v204
  %v206 = vpop.f32.mrb[0].mxu0
  %207 = vmatprep.mubr.bf16.mxu0 0
  %208 = vmatmul.mubr.bf16.gmra.mrb[0].mxu0 %v113
  %v209 = vpop.f32.mrb[0].mxu0
  %v210 = vadd.f32 0.0, %v209
  %v211 = vpop.f32.mrb[0].mxu0
  %v212 = vpop.f32.mrb[0].mxu0
  %v213 = vadd.f32 0.0, %v212
  %v214 = vpop.f32.mrb[0].mxu0
  %215 = vdwg.mxu0
  %216 = vst [vmem:[%s2] sm:$0xff] %v154
  %217 = vst [vmem:[%s2 + $0x8] sm:$0xff] %v157
  %218 = vst [vmem:[%s2 + $0x10] sm:$0xff] %v162
  %219 = vst [vmem:[%s2 + $0x18] sm:$0xff] %v165
  %220 = vst [vmem:[%s2 + $0x20] sm:$0xff] %v170
  %221 = vst [vmem:[%s2 + $0x28] sm:$0xff] %v173
  %222 = vst [vmem:[%s2 + $0x30] sm:$0xff] %v178
  %223 = vst [vmem:[%s2 + $0x38] sm:$0xff] %v181
  %224 = vst [vmem:[%s2 + $0x40] sm:$0xff] %v186
  %225 = vst [vmem:[%s2 + $0x48] sm:$0xff] %v189
  %226 = vst [vmem:[%s2 + $0x50] sm:$0xff] %v194
  %227 = vst [vmem:[%s2 + $0x58] sm:$0xff] %v197
  %228 = vst [vmem:[%s2 + $0x60] sm:$0xff] %v202
  %229 = vst [vmem:[%s2 + $0x68] sm:$0xff] %v205
  %230 = vst [vmem:[%s2 + $0x70] sm:$0xff] %v210
  %231 = vst [vmem:[%s2 + $0x78] sm:$0xff] %v213
  %v232 = vadd.f32 %v154, %v157
  %v233 = vadd.f32 %v232, %v162
  %v234 = vadd.f32 %v233, %v165
  %v235 = vadd.f32 %v234, %v170
  %v236 = vadd.f32 %v235, %v173
  %v237 = vadd.f32 %v236, %v178
  %v238 = vadd.f32 %v237, %v181
  %v239 = vadd.f32 %v238, %v186
  %v240 = vadd.f32 %v239, %v189
  %v241 = vadd.f32 %v240, %v194
  %v242 = vadd.f32 %v241, %v197
  %v243 = vadd.f32 %v242, %v202
  %v244 = vadd.f32 %v243, %v205
  %v245 = vadd.f32 %v244, %v210
  %v246 = vadd.f32 %v245, %v213
  %v247 = vrot.slane %v246, 4
  %v248 = vadd.f32 %v246, %v247
  %v249 = vrot.slane %v248, 2
  %v250 = vadd.f32 %v248, %v249
  %v251 = vrot.slane %v250, 1
  %v252 = vadd.f32 %v250, %v251
  %v253 = vmul.f32 %v154, %v154
  %v254 = vmul.f32 %v157, %v157
  %v255 = vmul.f32 %v162, %v162
  %v256 = vmul.f32 %v165, %v165
  %v257 = vmul.f32 %v170, %v170
  %v258 = vmul.f32 %v173, %v173
  %v259 = vmul.f32 %v178, %v178
  %v260 = vmul.f32 %v181, %v181
  %v261 = vmul.f32 %v186, %v186
  %v262 = vmul.f32 %v189, %v189
  %v263 = vmul.f32 %v194, %v194
  %v264 = vmul.f32 %v197, %v197
  %v265 = vmul.f32 %v202, %v202
  %v266 = vmul.f32 %v205, %v205
  %v267 = vmul.f32 %v210, %v210
  %v268 = vmul.f32 %v213, %v213
  %v269 = vadd.f32 %v253, %v254
  %v270 = vadd.f32 %v269, %v255
  %v271 = vadd.f32 %v270, %v256
  %v272 = vadd.f32 %v271, %v257
  %v273 = vadd.f32 %v272, %v258
  %v274 = vadd.f32 %v273, %v259
  %v275 = vadd.f32 %v274, %v260
  %v276 = vadd.f32 %v275, %v261
  %v277 = vadd.f32 %v276, %v262
  %v278 = vadd.f32 %v277, %v263
  %v279 = vadd.f32 %v278, %v264
  %v280 = vadd.f32 %v279, %v265
  %v281 = vadd.f32 %v280, %v266
  %v282 = vadd.f32 %v281, %v267
  %v283 = vadd.f32 %v282, %v268
  %v284 = vrot.slane %v283, 4
  %v285 = vadd.f32 %v283, %v284
  %v286 = vrot.slane %v285, 2
  %v287 = vadd.f32 %v285, %v286
  %v288 = vrot.slane %v287, 1
  %v289 = vadd.f32 %v287, %v288
  %vm290 = vcmask 1040384
  %v291 = vsel %vm290, %v252, %v289
  %292 = vst [vmem:[%s3] sm:$0x3] %v291
  // Predicated region
  $region10: #{_lambda_.4} parent=0 // pred_check
    _
  $region11: #{_lambda_.4} parent=0 // pred_check_branch
    %294 = sbr.rel (0) target = $region13
  $region12: #{_lambda_.4} parent=0 // pred_region
    _
  $region13: #{_lambda_.4} parent=0 // pred_fallthru
    _
  // Predicated region
  $region14: #{_lambda_.4} parent=0 // pred_check
    _
  $region15: #{_lambda_.4} parent=0 // pred_check_branch
    %296 = sbr.rel (0) target = $region17
  $region16: #{_lambda_.4} parent=0 // pred_region
    _
  $region17: #{_lambda_.4} parent=0 // pred_fallthru
    _
  // Predicated region
  $region18: #{_lambda_.4} parent=0 // pred_check
    _
  $region19: #{_lambda_.4} parent=0 // pred_check_branch
    %298 = sbr.rel (0) target = $region21
  $region20: #{_lambda_.4} parent=0 // pred_region
    _
  $region21: #{_lambda_.4} parent=0 // pred_fallthru
    _
  // Predicated region
  $region22: #{_lambda_.4} parent=0 // pred_check
    _
  $region23: #{_lambda_.4} parent=0 // pred_check_branch
    %300 = sbr.rel (0) target = $region25
  $region24: #{_lambda_.4} parent=0 // pred_region
    _
  $region25: #{_lambda_.4} parent=0 // pred_fallthru
    _

// kernel: _lambda_.7
$region0: #{_lambda_.7}
  #allocation0 [shape = 'u32[]', space=smem, size = 0x4, offset = 0x4, fixed_abs, tag = 'smem constant byte address 0x4 - core index']
  #allocation1 [shape = 'u32[144,128]{1,0:T(1,128)}', space=vmem, size = 0x12000, scoped, tag = 'internal scratch']
  %s0 = inlined_call_operand.vmem [shape: f32[128,128], index: 0, kind: input, shape index: {}]
  %s1 = inlined_call_operand.vmem [shape: f32[128,128], index: 1, kind: input, shape index: {}]
  %s2 = inlined_call_operand.vmem [shape: f32[4,128], index: 2, kind: input, shape index: {}]
  %s3 = inlined_call_operand.hbm [shape: f32[128,128], index: 3, kind: output, shape index: {}]
  %s4 = sld [smem:[#allocation0]]
  $region22: #{_lambda_.7} parent=0
    _
  %s6 = ssub.s32 1, %s4
  %s7 = scalar_select 0, %s6, %s4
  $region1: #{_lambda_.7} parent=0
    #allocation2 [shape = 'u8[65536]{0}', space=vmem, size = 0x10000, scoped, tag = 'output window, operand 0, single buffered']
    #allocation3 [shape = 's32[1]{0}', space=sflag, size = 0x4, scoped, tag = 'scoped memory for _lambda_.7']
    %8 = vsyncpa [#allocation3], 0
    // Predicated region
    $region2: #{_lambda_.7} parent=1 // pred_check
      _
    $region3: #{_lambda_.7} parent=1 // pred_check_branch
      %10 = sbr.rel (0) target = $region5
    $region4: #{_lambda_.7} parent=1 // pred_region
      _
    $region5: #{_lambda_.7} parent=1 // pred_fallthru
      _
    // Predicated region
    $region6: #{_lambda_.7} parent=1 // pred_check
      _
    $region7: #{_lambda_.7} parent=1 // pred_check_branch
      %12 = sbr.rel (0) target = $region9
    $region8: #{_lambda_.7} parent=1 // pred_region
      _
    $region9: #{_lambda_.7} parent=1 // pred_fallthru
      _
    // Predicated region
    $region10: #{_lambda_.7} parent=1 // pred_check
      _
    $region11: #{_lambda_.7} parent=1 // pred_check_branch
      %14 = sbr.rel (0) target = $region13
    $region12: #{_lambda_.7} parent=1 // pred_region
      _
    $region13: #{_lambda_.7} parent=1 // pred_fallthru
      _
    %v15 = vld [vmem:[%s2] sm:$0x1]
    %v16 = vld [vmem:[%s2 + $0x1] sm:$0x1]
    %v17 = vld [vmem:[%s2 + $0x2] sm:$0x1]
    %v18 = vld [vmem:[%s2 + $0x3] sm:$0x1]
    %v19 = vld [vmem:[%s0] sm:$0xff]
    %v20 = vld [vmem:[%s0 + $0x8] sm:$0xff]
    %v21 = vld [vmem:[%s0 + $0x10] sm:$0xff]
    %v22 = vld [vmem:[%s0 + $0x18] sm:$0xff]
    %v23 = vld [vmem:[%s0 + $0x20] sm:$0xff]
    %v24 = vld [vmem:[%s0 + $0x28] sm:$0xff]
    %v25 = vld [vmem:[%s0 + $0x30] sm:$0xff]
    %v26 = vld [vmem:[%s0 + $0x38] sm:$0xff]
    %v27 = vld [vmem:[%s0 + $0x40] sm:$0xff]
    %v28 = vld [vmem:[%s0 + $0x48] sm:$0xff]
    %v29 = vld [vmem:[%s0 + $0x50] sm:$0xff]
    %v30 = vld [vmem:[%s0 + $0x58] sm:$0xff]
    %v31 = vld [vmem:[%s0 + $0x60] sm:$0xff]
    %v32 = vld [vmem:[%s0 + $0x68] sm:$0xff]
    %v33 = vld [vmem:[%s0 + $0x70] sm:$0xff]
    %v34 = vld [vmem:[%s0 + $0x78] sm:$0xff]
    %v35 = vlaneseq
    %v36 = vshrl.u32 %v35, 7
    %v37 = vsub.s32 0, %v36
    %v38 = vrot.slane %v15, %v37
    %v39 = vmul.f32 %v19, %v38
    %v40 = vmul.f32 %v20, %v38
    %v41 = vmul.f32 %v21, %v38
    %v42 = vmul.f32 %v22, %v38
    %v43 = vmul.f32 %v23, %v38
    %v44 = vmul.f32 %v24, %v38
    %v45 = vmul.f32 %v25, %v38
    %v46 = vmul.f32 %v26, %v38
    %v47 = vmul.f32 %v27, %v38
    %v48 = vmul.f32 %v28, %v38
    %v49 = vmul.f32 %v29, %v38
    %v50 = vmul.f32 %v30, %v38
    %v51 = vmul.f32 %v31, %v38
    %v52 = vmul.f32 %v32, %v38
    %v53 = vmul.f32 %v33, %v38
    %v54 = vmul.f32 %v34, %v38
    %v55 = vlaneseq
    %v56 = vshrl.u32 %v55, 7
    %v57 = vsub.s32 0, %v56
    %v58 = vrot.slane %v16, %v57
    %v59 = vadd.f32 %v39, %v58
    %v60 = vadd.f32 %v40, %v58
    %v61 = vadd.f32 %v41, %v58
    %v62 = vadd.f32 %v42, %v58
    %v63 = vadd.f32 %v43, %v58
    %v64 = vadd.f32 %v44, %v58
    %v65 = vadd.f32 %v45, %v58
    %v66 = vadd.f32 %v46, %v58
    %v67 = vadd.f32 %v47, %v58
    %v68 = vadd.f32 %v48, %v58
    %v69 = vadd.f32 %v49, %v58
    %v70 = vadd.f32 %v50, %v58
    %v71 = vadd.f32 %v51, %v58
    %v72 = vadd.f32 %v52, %v58
    %v73 = vadd.f32 %v53, %v58
    %v74 = vadd.f32 %v54, %v58
    %v75 = vld [vmem:[%s1] sm:$0xff]
    %v76 = vld [vmem:[%s1 + $0x8] sm:$0xff]
    %v77 = vld [vmem:[%s1 + $0x10] sm:$0xff]
    %v78 = vld [vmem:[%s1 + $0x18] sm:$0xff]
    %v79 = vld [vmem:[%s1 + $0x20] sm:$0xff]
    %v80 = vld [vmem:[%s1 + $0x28] sm:$0xff]
    %v81 = vld [vmem:[%s1 + $0x30] sm:$0xff]
    %v82 = vld [vmem:[%s1 + $0x38] sm:$0xff]
    %v83 = vld [vmem:[%s1 + $0x40] sm:$0xff]
    %v84 = vld [vmem:[%s1 + $0x48] sm:$0xff]
    %v85 = vld [vmem:[%s1 + $0x50] sm:$0xff]
    %v86 = vld [vmem:[%s1 + $0x58] sm:$0xff]
    %v87 = vld [vmem:[%s1 + $0x60] sm:$0xff]
    %v88 = vld [vmem:[%s1 + $0x68] sm:$0xff]
    %v89 = vld [vmem:[%s1 + $0x70] sm:$0xff]
    %v90 = vld [vmem:[%s1 + $0x78] sm:$0xff]
    %v91 = vlaneseq
    %v92 = vshrl.u32 %v91, 7
    %v93 = vsub.s32 0, %v92
    %v94 = vrot.slane %v17, %v93
    %v95 = vmul.f32 %v75, %v94
    %v96 = vmul.f32 %v76, %v94
    %v97 = vmul.f32 %v77, %v94
    %v98 = vmul.f32 %v78, %v94
    %v99 = vmul.f32 %v79, %v94
    %v100 = vmul.f32 %v80, %v94
    %v101 = vmul.f32 %v81, %v94
    %v102 = vmul.f32 %v82, %v94
    %v103 = vmul.f32 %v83, %v94
    %v104 = vmul.f32 %v84, %v94
    %v105 = vmul.f32 %v85, %v94
    %v106 = vmul.f32 %v86, %v94
    %v107 = vmul.f32 %v87, %v94
    %v108 = vmul.f32 %v88, %v94
    %v109 = vmul.f32 %v89, %v94
    %v110 = vmul.f32 %v90, %v94
    %v111 = vadd.f32 %v59, %v95
    %v112 = vadd.f32 %v60, %v96
    %v113 = vadd.f32 %v61, %v97
    %v114 = vadd.f32 %v62, %v98
    %v115 = vadd.f32 %v63, %v99
    %v116 = vadd.f32 %v64, %v100
    %v117 = vadd.f32 %v65, %v101
    %v118 = vadd.f32 %v66, %v102
    %v119 = vadd.f32 %v67, %v103
    %v120 = vadd.f32 %v68, %v104
    %v121 = vadd.f32 %v69, %v105
    %v122 = vadd.f32 %v70, %v106
    %v123 = vadd.f32 %v71, %v107
    %v124 = vadd.f32 %v72, %v108
    %v125 = vadd.f32 %v73, %v109
    %v126 = vadd.f32 %v74, %v110
    %v127 = vlaneseq
    %v128 = vshrl.u32 %v127, 7
    %v129 = vsub.s32 0, %v128
    %v130 = vrot.slane %v18, %v129
    %v131 = vadd.f32 %v111, %v130
    %v132 = vadd.f32 %v112, %v130
    %v133 = vadd.f32 %v113, %v130
    %v134 = vadd.f32 %v114, %v130
    %v135 = vadd.f32 %v115, %v130
    %v136 = vadd.f32 %v116, %v130
    %v137 = vadd.f32 %v117, %v130
    %v138 = vadd.f32 %v118, %v130
    %v139 = vadd.f32 %v119, %v130
    %v140 = vadd.f32 %v120, %v130
    %v141 = vadd.f32 %v121, %v130
    %v142 = vadd.f32 %v122, %v130
    %v143 = vadd.f32 %v123, %v130
    %v144 = vadd.f32 %v124, %v130
    %v145 = vadd.f32 %v125, %v130
    %v146 = vadd.f32 %v126, %v130
    %v147 = vmax.f32 %v131, 0.0
    %v148 = vmax.f32 %v132, 0.0
    %v149 = vmax.f32 %v133, 0.0
    %v150 = vmax.f32 %v134, 0.0
    %v151 = vmax.f32 %v135, 0.0
    %v152 = vmax.f32 %v136, 0.0
    %v153 = vmax.f32 %v137, 0.0
    %v154 = vmax.f32 %v138, 0.0
    %v155 = vmax.f32 %v139, 0.0
    %v156 = vmax.f32 %v140, 0.0
    %v157 = vmax.f32 %v141, 0.0
    %v158 = vmax.f32 %v142, 0.0
    %v159 = vmax.f32 %v143, 0.0
    %v160 = vmax.f32 %v144, 0.0
    %v161 = vmax.f32 %v145, 0.0
    %v162 = vmax.f32 %v146, 0.0
    %163 = vst [vmem:[#allocation2] sm:$0xff] %v147
    %164 = vst [vmem:[#allocation2 + $0x8] sm:$0xff] %v148
    %165 = vst [vmem:[#allocation2 + $0x10] sm:$0xff] %v149
    %166 = vst [vmem:[#allocation2 + $0x18] sm:$0xff] %v150
    %167 = vst [vmem:[#allocation2 + $0x20] sm:$0xff] %v151
    %168 = vst [vmem:[#allocation2 + $0x28] sm:$0xff] %v152
    %169 = vst [vmem:[#allocation2 + $0x30] sm:$0xff] %v153
    %170 = vst [vmem:[#allocation2 + $0x38] sm:$0xff] %v154
    %171 = vst [vmem:[#allocation2 + $0x40] sm:$0xff] %v155
    %172 = vst [vmem:[#allocation2 + $0x48] sm:$0xff] %v156
    %173 = vst [vmem:[#allocation2 + $0x50] sm:$0xff] %v157
    %174 = vst [vmem:[#allocation2 + $0x58] sm:$0xff] %v158
    %175 = vst [vmem:[#allocation2 + $0x60] sm:$0xff] %v159
    %176 = vst [vmem:[#allocation2 + $0x68] sm:$0xff] %v160
    %177 = vst [vmem:[#allocation2 + $0x70] sm:$0xff] %v161
    %178 = vst [vmem:[#allocation2 + $0x78] sm:$0xff] %v162
    // Predicated region
    $region14: #{_lambda_.7} parent=1 // pred_check
      _
    $region15: #{_lambda_.7} parent=1 // pred_check_branch
      %180 = sbr.rel (0) target = $region17
    $region16: #{_lambda_.7} parent=1 // pred_region
      %s182 = ssub.s32 2048, 2048
      %183 = vsyncadd [#allocation3], %s182
      %s184 = sshll.u32 [#allocation2], 4
      %s185 = int_to_ptr.vmem [resolvable:$true] %s184
      %190 = dma.vmem_to_hbm [thread:$0]  %s185, 2048, %s3, [#allocation3], 128, 128, 8
    $region17: #{_lambda_.7} parent=1 // pred_fallthru
      _
    // Predicated region
    $region18: #{_lambda_.7} parent=1 // pred_check
      _
    $region19: #{_lambda_.7} parent=1 // pred_check_branch
      %192 = sbr.rel (0) target = $region21
    $region20: #{_lambda_.7} parent=1 // pred_region
      %193 = dma.done [#allocation3], 2048
    $region21: #{_lambda_.7} parent=1 // pred_fallthru
      _
    %194 = vsyncpa [#allocation3], 1

// kernel: _lambda_.6
$region0: #{_lambda_.6}
  #allocation0 [shape = 'u32[]', space=smem, size = 0x4, offset = 0x4, fixed_abs, tag = 'smem constant byte address 0x4 - core index']
  #allocation1 [shape = 'u32[144,128]{1,0:T(1,128)}', space=vmem, size = 0x12000, scoped, tag = 'internal scratch']
  %s0 = inlined_call_operand.vmem [shape: bf16[128,72], index: 0, kind: input, shape index: {}]
  %s1 = inlined_call_operand.vmem [shape: bf16[72,128], index: 1, kind: input, shape index: {}]
  %s2 = inlined_call_operand.vmem [shape: bf16[128,4], index: 2, kind: input, shape index: {}]
  %s3 = inlined_call_operand.vmem [shape: bf16[4,128], index: 3, kind: input, shape index: {}]
  %s4 = inlined_call_operand.vmem [shape: f32[128,128], index: 4, kind: output, shape index: {0}]
  %s5 = inlined_call_operand.vmem [shape: f32[128,128], index: 5, kind: output, shape index: {1}]
  %s6 = inlined_call_operand.vmem [shape: f32[1,2,128], index: 6, kind: output, shape index: {2}]
  %s7 = inlined_call_operand.vmem [shape: f32[1,2,128], index: 7, kind: output, shape index: {3}]
  %8 = xla_tuple %s4, %s5, %s6, %s7
  %s9 = sld [smem:[#allocation0]]
  $region50: #{_lambda_.6} parent=0
    _
  %s11 = ssub.s32 1, %s9
  %s12 = scalar_select 0, %s11, %s9
  // Predicated region
  $region2: #{_lambda_.6} parent=0 // pred_check
    _
  $region3: #{_lambda_.6} parent=0 // pred_check_branch
    %14 = sbr.rel (0) target = $region5
  $region4: #{_lambda_.6} parent=0 // pred_region
    _
  $region5: #{_lambda_.6} parent=0 // pred_fallthru
    _
  // Predicated region
  $region6: #{_lambda_.6} parent=0 // pred_check
    _
  $region7: #{_lambda_.6} parent=0 // pred_check_branch
    %16 = sbr.rel (0) target = $region9
  $region8: #{_lambda_.6} parent=0 // pred_region
    _
  $region9: #{_lambda_.6} parent=0 // pred_fallthru
    _
  // Predicated region
  $region10: #{_lambda_.6} parent=0 // pred_check
    _
  $region11: #{_lambda_.6} parent=0 // pred_check_branch
    %18 = sbr.rel (0) target = $region13
  $region12: #{_lambda_.6} parent=0 // pred_region
    _
  $region13: #{_lambda_.6} parent=0 // pred_fallthru
    _
  // Predicated region
  $region14: #{_lambda_.6} parent=0 // pred_check
    _
  $region15: #{_lambda_.6} parent=0 // pred_check_branch
    %20 = sbr.rel (0) target = $region17
  $region16: #{_lambda_.6} parent=0 // pred_region
    _
  $region17: #{_lambda_.6} parent=0 // pred_fallthru
    _
  %v22 = vld [vmem:[%s0] sm:$0xf]
  %v23 = vld [vmem:[%s0 + $0x4] sm:$0xf]
  %v24 = vld [vmem:[%s0 + $0x8] sm:$0xf]
  %v25 = vld [vmem:[%s0 + $0xc] sm:$0xf]
  %v26 = vld [vmem:[%s0 + $0x10] sm:$0xf]
  %v27 = vld [vmem:[%s0 + $0x14] sm:$0xf]
  %v28 = vld [vmem:[%s0 + $0x18] sm:$0xf]
  %v29 = vld [vmem:[%s0 + $0x1c] sm:$0xf]
  %v30 = vld [vmem:[%s0 + $0x20] sm:$0xf]
  %v31 = vld [vmem:[%s0 + $0x24] sm:$0xf]
  %v32 = vld [vmem:[%s0 + $0x28] sm:$0xf]
  %v33 = vld [vmem:[%s0 + $0x2c] sm:$0xf]
  %v34 = vld [vmem:[%s0 + $0x30] sm:$0xf]
  %v35 = vld [vmem:[%s0 + $0x34] sm:$0xf]
  %v36 = vld [vmem:[%s0 + $0x38] sm:$0xf]
  %v37 = vld [vmem:[%s0 + $0x3c] sm:$0xf]
  %v38 = vld [vmem:[%s1] sm:$0xf]
  %v39 = vld [vmem:[%s1 + $0x4] sm:$0xf]
  %v40 = vld [vmem:[%s1 + $0x8] sm:$0xf]
  %v41 = vld [vmem:[%s1 + $0xc] sm:$0xf]
  %v42 = vld [vmem:[%s1 + $0x10] sm:$0xf]
  %v43 = vld [vmem:[%s1 + $0x14] sm:$0xf]
  %v44 = vld [vmem:[%s1 + $0x18] sm:$0xf]
  %v45 = vld [vmem:[%s1 + $0x1c] sm:$0xf]
  %v46 = vld [vmem:[%s1 + $0x20] sm:$0xf]
  %v63 = vunpack.c.l.b16 %v22
  %v64 = vunpack.c.l.b16 %v23
  %v65 = vunpack.c.l.b16 %v24
  %v66 = vunpack.c.l.b16 %v25
  %v67 = vunpack.c.l.b16 %v26
  %v68 = vunpack.c.l.b16 %v27
  %v69 = vunpack.c.l.b16 %v28
  %v70 = vunpack.c.l.b16 %v29
  %v71 = vunpack.c.l.b16 %v30
  %v72 = vunpack.c.l.b16 %v31
  %v73 = vunpack.c.l.b16 %v32
  %v74 = vunpack.c.l.b16 %v33
  %v75 = vunpack.c.l.b16 %v34
  %v76 = vunpack.c.l.b16 %v35
  %v77 = vunpack.c.l.b16 %v36
  %v78 = vunpack.c.l.b16 %v37
  %v79 = vpack.c.b16 %v64, %v63
  %v80 = vpack.c.b16 %v66, %v65
  %v81 = vpack.c.b16 %v68, %v67
  %v82 = vpack.c.b16 %v70, %v69
  %v83 = vpack.c.b16 %v72, %v71
  %v84 = vpack.c.b16 %v74, %v73
  %v85 = vpack.c.b16 %v76, %v75
  %v86 = vpack.c.b16 %v78, %v77
  %v96 = vunpack.c.l.b16 %v38
  %v97 = vunpack.c.l.b16 %v39
  %v98 = vunpack.c.l.b16 %v40
  %v99 = vunpack.c.l.b16 %v41
  %v100 = vunpack.c.l.b16 %v42
  %v101 = vunpack.c.l.b16 %v43
  %v102 = vunpack.c.l.b16 %v44
  %v103 = vunpack.c.l.b16 %v45
  %v104 = vunpack.c.l.b16 %v46
  %v105 = vpack.c.b16 %v97, %v96
  %v106 = vpack.c.b16 %v99, %v98
  %v107 = vpack.c.b16 %v101, %v100
  %v108 = vpack.c.b16 %v103, %v102
  %v109 = vpack.c.b16 %v104, %v104
  %vm114 = vcmask 588800
  %v116 = vsel %vm114, %v79, 0
  %v119 = vsel %vm114, %v80, 0
  %v122 = vsel %vm114, %v81, 0
  %v125 = vsel %vm114, %v82, 0
  %v128 = vsel %vm114, %v83, 0
  %v131 = vsel %vm114, %v84, 0
  %v134 = vsel %vm114, %v85, 0
  %v137 = vsel %vm114, %v86, 0
  %vm139 = vcmask 1043456
  %v141 = vsel %vm139, %v109, 0
  %143 = vmatprep.subr.bf16.mxu0 0
  %144 = vmatpush1.bf16.msra.mxu0 %v105
  %145 = vmatprep.subr.bf16.mxu0 0
  %146 = vmatpush1.bf16.msra.mxu0 %v106
  %147 = vmatprep.subr.bf16.mxu0 0
  %148 = vmatpush1.bf16.msra.mxu0 %v107
  %149 = vmatprep.subr.bf16.mxu0 0
  %150 = vmatpush1.bf16.msra.mxu0 %v108
  %151 = vmatprep.subr.bf16.mxu0 0
  %152 = vmatpush1.bf16.msra.mxu0 %v141
  %153 = vmatprep.subr.bf16.mxu0 0
  %154 = vmatpush1.bf16.msra.mxu0 0
  %155 = vmatprep.subr.bf16.mxu0 0
  %156 = vmatpush1.bf16.msra.mxu0 0
  %157 = vmatprep.subr.bf16.mxu0 0
  %158 = vmatpush1.bf16.msra.mxu0 0
  %159 = vmatprep.subr.bf16.mxu0 0
  %160 = vmatpush1.bf16.msra.mxu0 0
  %161 = vmatprep.subr.bf16.mxu0 0
  %162 = vmatpush1.bf16.msra.mxu0 0
  %163 = vmatprep.subr.bf16.mxu0 0
  %164 = vmatpush1.bf16.msra.mxu0 0
  %165 = vmatprep.subr.bf16.mxu0 0
  %166 = vmatpush1.bf16.msra.mxu0 0
  %167 = vmatprep.subr.bf16.mxu0 0
  %168 = vmatpush1.bf16.msra.mxu0 0
  %169 = vmatprep.subr.bf16.mxu0 0
  %170 = vmatpush1.bf16.msra.mxu0 0
  %171 = vmatprep.subr.bf16.mxu0 0
  %172 = vmatpush1.bf16.msra.mxu0 0
  %173 = vmatprep.subr.bf16.mxu0 0
  %174 = vmatpush1.bf16.msra.mxu0 0
  %175 = vmatprep.mubr.bf16.mxu0 0
  %176 = vmatmul.mubr.bf16.gmra.mrb[0].mxu0 %v116
  %v177 = vpop.f32.mrb[0].mxu0
  %v178 = vadd.f32 0.0, %v177
  %v179 = vpop.f32.mrb[0].mxu0
  %v180 = vpop.f32.mrb[0].mxu0
  %v181 = vadd.f32 0.0, %v180
  %v182 = vpop.f32.mrb[0].mxu0
  %183 = vmatprep.mubr.bf16.mxu0 0
  %184 = vmatmul.mubr.bf16.gmra.mrb[0].mxu0 %v119
  %v185 = vpop.f32.mrb[0].mxu0
  %v186 = vadd.f32 0.0, %v185
  %v187 = vpop.f32.mrb[0].mxu0
  %v188 = vpop.f32.mrb[0].mxu0
  %v189 = vadd.f32 0.0, %v188
  %v190 = vpop.f32.mrb[0].mxu0
  %191 = vmatprep.mubr.bf16.mxu0 0
  %192 = vmatmul.mubr.bf16.gmra.mrb[0].mxu0 %v122
  %v193 = vpop.f32.mrb[0].mxu0
  %v194 = vadd.f32 0.0, %v193
  %v195 = vpop.f32.mrb[0].mxu0
  %v196 = vpop.f32.mrb[0].mxu0
  %v197 = vadd.f32 0.0, %v196
  %v198 = vpop.f32.mrb[0].mxu0
  %199 = vmatprep.mubr.bf16.mxu0 0
  %200 = vmatmul.mubr.bf16.gmra.mrb[0].mxu0 %v125
  %v201 = vpop.f32.mrb[0].mxu0
  %v202 = vadd.f32 0.0, %v201
  %v203 = vpop.f32.mrb[0].mxu0
  %v204 = vpop.f32.mrb[0].mxu0
  %v205 = vadd.f32 0.0, %v204
  %v206 = vpop.f32.mrb[0].mxu0
  %207 = vmatprep.mubr.bf16.mxu0 0
  %208 = vmatmul.mubr.bf16.gmra.mrb[0].mxu0 %v128
  %v209 = vpop.f32.mrb[0].mxu0
  %v210 = vadd.f32 0.0, %v209
  %v211 = vpop.f32.mrb[0].mxu0
  %v212 = vpop.f32.mrb[0].mxu0
  %v213 = vadd.f32 0.0, %v212
  %v214 = vpop.f32.mrb[0].mxu0
  %215 = vmatprep.mubr.bf16.mxu0 0
  %216 = vmatmul.mubr.bf16.gmra.mrb[0].mxu0 %v131
  %v217 = vpop.f32.mrb[0].mxu0
  %v218 = vadd.f32 0.0, %v217
  %v219 = vpop.f32.mrb[0].mxu0
  %v220 = vpop.f32.mrb[0].mxu0
  %v221 = vadd.f32 0.0, %v220
  %v222 = vpop.f32.mrb[0].mxu0
  %223 = vmatprep.mubr.bf16.mxu0 0
  %224 = vmatmul.mubr.bf16.gmra.mrb[0].mxu0 %v134
  %v225 = vpop.f32.mrb[0].mxu0
  %v226 = vadd.f32 0.0, %v225
  %v227 = vpop.f32.mrb[0].mxu0
  %v228 = vpop.f32.mrb[0].mxu0
  %v229 = vadd.f32 0.0, %v228
  %v230 = vpop.f32.mrb[0].mxu0
  %231 = vmatprep.mubr.bf16.mxu0 0
  %232 = vmatmul.mubr.bf16.gmra.mrb[0].mxu0 %v137
  %v233 = vpop.f32.mrb[0].mxu0
  %v234 = vadd.f32 0.0, %v233
  %v235 = vpop.f32.mrb[0].mxu0
  %v236 = vpop.f32.mrb[0].mxu0
  %v237 = vadd.f32 0.0, %v236
  %v238 = vpop.f32.mrb[0].mxu0
  %239 = vdwg.mxu0
  %v240 = vld [vmem:[%s2] sm:$0xf]
  %v241 = vld [vmem:[%s2 + $0x4] sm:$0xf]
  %v242 = vld [vmem:[%s2 + $0x8] sm:$0xf]
  %v243 = vld [vmem:[%s2 + $0xc] sm:$0xf]
  %v244 = vld [vmem:[%s2 + $0x10] sm:$0xf]
  %v245 = vld [vmem:[%s2 + $0x14] sm:$0xf]
  %v246 = vld [vmem:[%s2 + $0x18] sm:$0xf]
  %v247 = vld [vmem:[%s2 + $0x1c] sm:$0xf]
  %v248 = vld [vmem:[%s2 + $0x20] sm:$0xf]
  %v249 = vld [vmem:[%s2 + $0x24] sm:$0xf]
  %v250 = vld [vmem:[%s2 + $0x28] sm:$0xf]
  %v251 = vld [vmem:[%s2 + $0x2c] sm:$0xf]
  %v252 = vld [vmem:[%s2 + $0x30] sm:$0xf]
  %v253 = vld [vmem:[%s2 + $0x34] sm:$0xf]
  %v254 = vld [vmem:[%s2 + $0x38] sm:$0xf]
  %v255 = vld [vmem:[%s2 + $0x3c] sm:$0xf]
  %v256 = vld [vmem:[%s3] sm:$0x3]
  %v273 = vunpack.c.l.b16 %v240
  %v274 = vunpack.c.l.b16 %v241
  %v275 = vunpack.c.l.b16 %v242
  %v276 = vunpack.c.l.b16 %v243
  %v277 = vunpack.c.l.b16 %v244
  %v278 = vunpack.c.l.b16 %v245
  %v279 = vunpack.c.l.b16 %v246
  %v280 = vunpack.c.l.b16 %v247
  %v281 = vunpack.c.l.b16 %v248
  %v282 = vunpack.c.l.b16 %v249
  %v283 = vunpack.c.l.b16 %v250
  %v284 = vunpack.c.l.b16 %v251
  %v285 = vunpack.c.l.b16 %v252
  %v286 = vunpack.c.l.b16 %v253
  %v287 = vunpack.c.l.b16 %v254
  %v288 = vunpack.c.l.b16 %v255
  %v289 = vpack.c.b16 %v274, %v273
  %v290 = vpack.c.b16 %v276, %v275
  %v291 = vpack.c.b16 %v278, %v277
  %v292 = vpack.c.b16 %v280, %v279
  %v293 = vpack.c.b16 %v282, %v281
  %v294 = vpack.c.b16 %v284, %v283
  %v295 = vpack.c.b16 %v286, %v285
  %v296 = vpack.c.b16 %v288, %v287
  %vm297 = vcmask 31744
  %v299 = vsel %vm297, %v289, 0
  %v302 = vsel %vm297, %v290, 0
  %v305 = vsel %vm297, %v291, 0
  %v308 = vsel %vm297, %v292, 0
  %v311 = vsel %vm297, %v293, 0
  %v314 = vsel %vm297, %v294, 0
  %v317 = vsel %vm297, %v295, 0
  %v320 = vsel %vm297, %v296, 0
  %vm322 = vcmask 1041408
  %v324 = vsel %vm322, %v256, 0
  %326 = vmatprep.subr.bf16.mxu0 0
  %327 = vmatpush1.bf16.msra.mxu0 %v324
  %328 = vmatprep.subr.bf16.mxu0 0
  %329 = vmatpush1.bf16.msra.mxu0 0
  %330 = vmatprep.subr.bf16.mxu0 0
  %331 = vmatpush1.bf16.msra.mxu0 0
  %332 = vmatprep.subr.bf16.mxu0 0
  %333 = vmatpush1.bf16.msra.mxu0 0
  %334 = vmatprep.subr.bf16.mxu0 0
  %335 = vmatpush1.bf16.msra.mxu0 0
  %336 = vmatprep.subr.bf16.mxu0 0
  %337 = vmatpush1.bf16.msra.mxu0 0
  %338 = vmatprep.subr.bf16.mxu0 0
  %339 = vmatpush1.bf16.msra.mxu0 0
  %340 = vmatprep.subr.bf16.mxu0 0
  %341 = vmatpush1.bf16.msra.mxu0 0
  %342 = vmatprep.subr.bf16.mxu0 0
  %343 = vmatpush1.bf16.msra.mxu0 0
  %344 = vmatprep.subr.bf16.mxu0 0
  %345 = vmatpush1.bf16.msra.mxu0 0
  %346 = vmatprep.subr.bf16.mxu0 0
  %347 = vmatpush1.bf16.msra.mxu0 0
  %348 = vmatprep.subr.bf16.mxu0 0
  %349 = vmatpush1.bf16.msra.mxu0 0
  %350 = vmatprep.subr.bf16.mxu0 0
  %351 = vmatpush1.bf16.msra.mxu0 0
  %352 = vmatprep.subr.bf16.mxu0 0
  %353 = vmatpush1.bf16.msra.mxu0 0
  %354 = vmatprep.subr.bf16.mxu0 0
  %355 = vmatpush1.bf16.msra.mxu0 0
  %356 = vmatprep.subr.bf16.mxu0 0
  %357 = vmatpush1.bf16.msra.mxu0 0
  %358 = vmatprep.mubr.bf16.mxu0 0
  %359 = vmatmul.mubr.bf16.gmra.mrb[0].mxu0 %v299
  %v360 = vpop.f32.mrb[0].mxu0
  %v361 = vadd.f32 0.0, %v360
  %v362 = vpop.f32.mrb[0].mxu0
  %v363 = vpop.f32.mrb[0].mxu0
  %v364 = vadd.f32 0.0, %v363
  %v365 = vpop.f32.mrb[0].mxu0
  %366 = vmatprep.mubr.bf16.mxu0 0
  %367 = vmatmul.mubr.bf16.gmra.mrb[0].mxu0 %v302
  %v368 = vpop.f32.mrb[0].mxu0
  %v369 = vadd.f32 0.0, %v368
  %v370 = vpop.f32.mrb[0].mxu0
  %v371 = vpop.f32.mrb[0].mxu0
  %v372 = vadd.f32 0.0, %v371
  %v373 = vpop.f32.mrb[0].mxu0
  %374 = vmatprep.mubr.bf16.mxu0 0
  %375 = vmatmul.mubr.bf16.gmra.mrb[0].mxu0 %v305
  %v376 = vpop.f32.mrb[0].mxu0
  %v377 = vadd.f32 0.0, %v376
  %v378 = vpop.f32.mrb[0].mxu0
  %v379 = vpop.f32.mrb[0].mxu0
  %v380 = vadd.f32 0.0, %v379
  %v381 = vpop.f32.mrb[0].mxu0
  %382 = vmatprep.mubr.bf16.mxu0 0
  %383 = vmatmul.mubr.bf16.gmra.mrb[0].mxu0 %v308
  %v384 = vpop.f32.mrb[0].mxu0
  %v385 = vadd.f32 0.0, %v384
  %v386 = vpop.f32.mrb[0].mxu0
  %v387 = vpop.f32.mrb[0].mxu0
  %v388 = vadd.f32 0.0, %v387
  %v389 = vpop.f32.mrb[0].mxu0
  %390 = vmatprep.mubr.bf16.mxu0 0
  %391 = vmatmul.mubr.bf16.gmra.mrb[0].mxu0 %v311
  %v392 = vpop.f32.mrb[0].mxu0
  %v393 = vadd.f32 0.0, %v392
  %v394 = vpop.f32.mrb[0].mxu0
  %v395 = vpop.f32.mrb[0].mxu0
  %v396 = vadd.f32 0.0, %v395
  %v397 = vpop.f32.mrb[0].mxu0
  %398 = vmatprep.mubr.bf16.mxu0 0
  %399 = vmatmul.mubr.bf16.gmra.mrb[0].mxu0 %v314
  %v400 = vpop.f32.mrb[0].mxu0
  %v401 = vadd.f32 0.0, %v400
  %v402 = vpop.f32.mrb[0].mxu0
  %v403 = vpop.f32.mrb[0].mxu0
  %v404 = vadd.f32 0.0, %v403
  %v405 = vpop.f32.mrb[0].mxu0
  %406 = vmatprep.mubr.bf16.mxu0 0
  %407 = vmatmul.mubr.bf16.gmra.mrb[0].mxu0 %v317
  %v408 = vpop.f32.mrb[0].mxu0
  %v409 = vadd.f32 0.0, %v408
  %v410 = vpop.f32.mrb[0].mxu0
  %v411 = vpop.f32.mrb[0].mxu0
  %v412 = vadd.f32 0.0, %v411
  %v413 = vpop.f32.mrb[0].mxu0
  %414 = vmatprep.mubr.bf16.mxu0 0
  %415 = vmatmul.mubr.bf16.gmra.mrb[0].mxu0 %v320
  %v416 = vpop.f32.mrb[0].mxu0
  %v417 = vadd.f32 0.0, %v416
  %v418 = vpop.f32.mrb[0].mxu0
  %v419 = vpop.f32.mrb[0].mxu0
  %v420 = vadd.f32 0.0, %v419
  %v421 = vpop.f32.mrb[0].mxu0
  %422 = vdwg.mxu0
  %423 = vst [vmem:[%s4] sm:$0xff] %v178
  %424 = vst [vmem:[%s4 + $0x8] sm:$0xff] %v181
  %425 = vst [vmem:[%s4 + $0x10] sm:$0xff] %v186
  %426 = vst [vmem:[%s4 + $0x18] sm:$0xff] %v189
  %427 = vst [vmem:[%s4 + $0x20] sm:$0xff] %v194
  %428 = vst [vmem:[%s4 + $0x28] sm:$0xff] %v197
  %429 = vst [vmem:[%s4 + $0x30] sm:$0xff] %v202
  %430 = vst [vmem:[%s4 + $0x38] sm:$0xff] %v205
  %431 = vst [vmem:[%s4 + $0x40] sm:$0xff] %v210
  %432 = vst [vmem:[%s4 + $0x48] sm:$0xff] %v213
  %433 = vst [vmem:[%s4 + $0x50] sm:$0xff] %v218
  %434 = vst [vmem:[%s4 + $0x58] sm:$0xff] %v221
  %435 = vst [vmem:[%s4 + $0x60] sm:$0xff] %v226
  %436 = vst [vmem:[%s4 + $0x68] sm:$0xff] %v229
  %437 = vst [vmem:[%s4 + $0x70] sm:$0xff] %v234
  %438 = vst [vmem:[%s4 + $0x78] sm:$0xff] %v237
  %439 = vst [vmem:[%s5] sm:$0xff] %v361
  %440 = vst [vmem:[%s5 + $0x8] sm:$0xff] %v364
  %441 = vst [vmem:[%s5 + $0x10] sm:$0xff] %v369
  %442 = vst [vmem:[%s5 + $0x18] sm:$0xff] %v372
  %443 = vst [vmem:[%s5 + $0x20] sm:$0xff] %v377
  %444 = vst [vmem:[%s5 + $0x28] sm:$0xff] %v380
  %445 = vst [vmem:[%s5 + $0x30] sm:$0xff] %v385
  %446 = vst [vmem:[%s5 + $0x38] sm:$0xff] %v388
  %447 = vst [vmem:[%s5 + $0x40] sm:$0xff] %v393
  %448 = vst [vmem:[%s5 + $0x48] sm:$0xff] %v396
  %449 = vst [vmem:[%s5 + $0x50] sm:$0xff] %v401
  %450 = vst [vmem:[%s5 + $0x58] sm:$0xff] %v404
  %451 = vst [vmem:[%s5 + $0x60] sm:$0xff] %v409
  %452 = vst [vmem:[%s5 + $0x68] sm:$0xff] %v412
  %453 = vst [vmem:[%s5 + $0x70] sm:$0xff] %v417
  %454 = vst [vmem:[%s5 + $0x78] sm:$0xff] %v420
  %v455 = vadd.f32 %v178, %v181
  %v456 = vadd.f32 %v455, %v186
  %v457 = vadd.f32 %v456, %v189
  %v458 = vadd.f32 %v457, %v194
  %v459 = vadd.f32 %v458, %v197
  %v460 = vadd.f32 %v459, %v202
  %v461 = vadd.f32 %v460, %v205
  %v462 = vadd.f32 %v461, %v210
  %v463 = vadd.f32 %v462, %v213
  %v464 = vadd.f32 %v463, %v218
  %v465 = vadd.f32 %v464, %v221
  %v466 = vadd.f32 %v465, %v226
  %v467 = vadd.f32 %v466, %v229
  %v468 = vadd.f32 %v467, %v234
  %v469 = vadd.f32 %v468, %v237
  %v470 = vrot.slane %v469, 4
  %v471 = vadd.f32 %v469, %v470
  %v472 = vrot.slane %v471, 2
  %v473 = vadd.f32 %v471, %v472
  %v474 = vrot.slane %v473, 1
  %v475 = vadd.f32 %v473, %v474
  %v476 = vmul.f32 %v178, %v178
  %v477 = vmul.f32 %v181, %v181
  %v478 = vmul.f32 %v186, %v186
  %v479 = vmul.f32 %v189, %v189
  %v480 = vmul.f32 %v194, %v194
  %v481 = vmul.f32 %v197, %v197
  %v482 = vmul.f32 %v202, %v202
  %v483 = vmul.f32 %v205, %v205
  %v484 = vmul.f32 %v210, %v210
  %v485 = vmul.f32 %v213, %v213
  %v486 = vmul.f32 %v218, %v218
  %v487 = vmul.f32 %v221, %v221
  %v488 = vmul.f32 %v226, %v226
  %v489 = vmul.f32 %v229, %v229
  %v490 = vmul.f32 %v234, %v234
  %v491 = vmul.f32 %v237, %v237
  %v492 = vadd.f32 %v476, %v477
  %v493 = vadd.f32 %v492, %v478
  %v494 = vadd.f32 %v493, %v479
  %v495 = vadd.f32 %v494, %v480
  %v496 = vadd.f32 %v495, %v481
  %v497 = vadd.f32 %v496, %v482
  %v498 = vadd.f32 %v497, %v483
  %v499 = vadd.f32 %v498, %v484
  %v500 = vadd.f32 %v499, %v485
  %v501 = vadd.f32 %v500, %v486
  %v502 = vadd.f32 %v501, %v487
  %v503 = vadd.f32 %v502, %v488
  %v504 = vadd.f32 %v503, %v489
  %v505 = vadd.f32 %v504, %v490
  %v506 = vadd.f32 %v505, %v491
  %v507 = vrot.slane %v506, 4
  %v508 = vadd.f32 %v506, %v507
  %v509 = vrot.slane %v508, 2
  %v510 = vadd.f32 %v508, %v509
  %v511 = vrot.slane %v510, 1
  %v512 = vadd.f32 %v510, %v511
  %vm513 = vcmask 1040384
  %v514 = vsel %vm513, %v475, %v512
  %515 = vst [vmem:[%s6] sm:$0x3] %v514
  %v516 = vadd.f32 %v361, %v364
  %v517 = vadd.f32 %v516, %v369
  %v518 = vadd.f32 %v517, %v372
  %v519 = vadd.f32 %v518, %v377
  %v520 = vadd.f32 %v519, %v380
  %v521 = vadd.f32 %v520, %v385
  %v522 = vadd.f32 %v521, %v388
  %v523 = vadd.f32 %v522, %v393
  %v524 = vadd.f32 %v523, %v396
  %v525 = vadd.f32 %v524, %v401
  %v526 = vadd.f32 %v525, %v404
  %v527 = vadd.f32 %v526, %v409
  %v528 = vadd.f32 %v527, %v412
  %v529 = vadd.f32 %v528, %v417
  %v530 = vadd.f32 %v529, %v420
  %v531 = vrot.slane %v530, 4
  %v532 = vadd.f32 %v530, %v531
  %v533 = vrot.slane %v532, 2
  %v534 = vadd.f32 %v532, %v533
  %v535 = vrot.slane %v534, 1
  %v536 = vadd.f32 %v534, %v535
  %v537 = vmul.f32 %v361, %v361
  %v538 = vmul.f32 %v364, %v364
  %v539 = vmul.f32 %v369, %v369
  %v540 = vmul.f32 %v372, %v372
  %v541 = vmul.f32 %v377, %v377
  %v542 = vmul.f32 %v380, %v380
  %v543 = vmul.f32 %v385, %v385
  %v544 = vmul.f32 %v388, %v388
  %v545 = vmul.f32 %v393, %v393
  %v546 = vmul.f32 %v396, %v396
  %v547 = vmul.f32 %v401, %v401
  %v548 = vmul.f32 %v404, %v404
  %v549 = vmul.f32 %v409, %v409
  %v550 = vmul.f32 %v412, %v412
  %v551 = vmul.f32 %v417, %v417
  %v552 = vmul.f32 %v420, %v420
  %v553 = vadd.f32 %v537, %v538
  %v554 = vadd.f32 %v553, %v539
  %v555 = vadd.f32 %v554, %v540
  %v556 = vadd.f32 %v555, %v541
  %v557 = vadd.f32 %v556, %v542
  %v558 = vadd.f32 %v557, %v543
  %v559 = vadd.f32 %v558, %v544
  %v560 = vadd.f32 %v559, %v545
  %v561 = vadd.f32 %v560, %v546
  %v562 = vadd.f32 %v561, %v547
  %v563 = vadd.f32 %v562, %v548
  %v564 = vadd.f32 %v563, %v549
  %v565 = vadd.f32 %v564, %v550
  %v566 = vadd.f32 %v565, %v551
  %v567 = vadd.f32 %v566, %v552
  %v568 = vrot.slane %v567, 4
  %v569 = vadd.f32 %v567, %v568
  %v570 = vrot.slane %v569, 2
  %v571 = vadd.f32 %v569, %v570
  %v572 = vrot.slane %v571, 1
  %v573 = vadd.f32 %v571, %v572
  %v574 = vsel %vm513, %v536, %v573
  %575 = vst [vmem:[%s7] sm:$0x3] %v574
  // Predicated region
  $region18: #{_lambda_.6} parent=0 // pred_check
    _
  $region19: #{_lambda_.6} parent=0 // pred_check_branch
    %577 = sbr.rel (0) target = $region21
  $region20: #{_lambda_.6} parent=0 // pred_region
    _
  $region21: #{_lambda_.6} parent=0 // pred_fallthru
    _
  // Predicated region
  $region22: #{_lambda_.6} parent=0 // pred_check
    _
  $region23: #{_lambda_.6} parent=0 // pred_check_branch
    %579 = sbr.rel (0) target = $region25
  $region24: #{_lambda_.6} parent=0 // pred_region
    _
  $region25: #{_lambda_.6} parent=0 // pred_fallthru
    _
  // Predicated region
  $region26: #{_lambda_.6} parent=0 // pred_check
    _
  $region27: #{_lambda_.6} parent=0 // pred_check_branch
    %581 = sbr.rel (0) target = $region29
  $region28: #{_lambda_.6} parent=0 // pred_region
    _
  $region29: #{_lambda_.6} parent=0 // pred_fallthru
    _
  // Predicated region
  $region30: #{_lambda_.6} parent=0 // pred_check
    _
  $region31: #{_lambda_.6} parent=0 // pred_check_branch
    %583 = sbr.rel (0) target = $region33
  $region32: #{_lambda_.6} parent=0 // pred_region
    _
  $region33: #{_lambda_.6} parent=0 // pred_fallthru
    _
  // Predicated region
  $region34: #{_lambda_.6} parent=0 // pred_check
    _
  $region35: #{_lambda_.6} parent=0 // pred_check_branch
    %585 = sbr.rel (0) target = $region37
  $region36: #{_lambda_.6} parent=0 // pred_region
    _
  $region37: #{_lambda_.6} parent=0 // pred_fallthru
    _
  // Predicated region
  $region38: #{_lambda_.6} parent=0 // pred_check
    _
  $region39: #{_lambda_.6} parent=0 // pred_check_branch
    %587 = sbr.rel (0) target = $region41
  $region40: #{_lambda_.6} parent=0 // pred_region
    _
  $region41: #{_lambda_.6} parent=0 // pred_fallthru
    _
  // Predicated region
  $region42: #{_lambda_.6} parent=0 // pred_check
    _
  $region43: #{_lambda_.6} parent=0 // pred_check_branch
    %589 = sbr.rel (0) target = $region45
  $region44: #{_lambda_.6} parent=0 // pred_region
    _
  $region45: #{_lambda_.6} parent=0 // pred_fallthru
    _
  // Predicated region
  $region46: #{_lambda_.6} parent=0 // pred_check
    _
  $region47: #{_lambda_.6} parent=0 // pred_check_branch
    %591 = sbr.rel (0) target = $region49
  $region48: #{_lambda_.6} parent=0 // pred_region
    _
  $region49: #{_lambda_.6} parent=0 // pred_fallthru
    _

</llo_original>
